<compile_context>
chip_gen: v5e
topology: v5e:2x2
jax: 0.10.0
libtpu: 0.0.40
codegen_flags: <defaults>
</compile_context>

<pallas_src>
import functools
import math

import jax
import jax.numpy as jnp
from jax import lax
from jax.experimental import pallas as pl
from jax.experimental.pallas import tpu as pltpu

LANE = 128  # lane-dense padding width for the fused-QKV and classifier outputs

CFG = dict(vocab=100, max_pos=64, type_vocab=2, hidden=32, heads=2,
           inter=64, layers=2, num_labels=5)


# ----------------------------- fused Pallas kernel ------------------------------


def _encoder_kernel(x_ref, kb_ref, eg_ref, eb_ref,
                    wqkv_ref, bqkv_ref, wo_ref, bo_ref, g1_ref, b1_ref,
                    wi_ref, bi_ref, wo2_ref, bo2_ref, g2_ref, b2_ref,
                    cw_ref, cb_ref, out_ref,
                    *, num_layers, num_heads, head_dim, hidden, seq, rows, eps):
    """Full encoder + classifier for `rows` batch rows. x_ref: [rows*S, H] f32 emb sum."""
    f32 = jnp.float32
    bf16 = jnp.bfloat16
    H, S, dh = hidden, seq, head_dim

    def layernorm(h, g, b):
        mu = jnp.mean(h, axis=-1, keepdims=True)
        d = h - mu
        var = jnp.mean(d * d, axis=-1, keepdims=True)
        return d * lax.rsqrt(var + eps) * g + b

    # Embedding LayerNorm over the whole [rows*S, H] block (token-wise op).
    x = layernorm(x_ref[...], eg_ref[...], eb_ref[...])

    for l in range(num_layers):
        x_bf = x.astype(bf16)                                   # hoisted cast (Q/K/V matmul)

        # ----- fused QKV projection: one lane-dense matmul per layer -----
        qkv = jnp.dot(x_bf, wqkv_ref[l], preferred_element_type=f32) + bqkv_ref[l]
        qkv_bf = qkv.astype(bf16)                               # bf16 inputs for MXU dots

        # ----- per-(row, head) attention; merged ctx via static slices/concats -----
        row_ctx = []
        for r in range(rows):
            kbias = kb_ref[r]                                   # [1, S] key-padding bias
            lo = r * S
            head_ctx = []
            for h in range(num_heads):
                q = qkv_bf[lo:lo + S, h * dh:(h + 1) * dh]                  # [S, dh]
                k = qkv_bf[lo:lo + S, H + h * dh:H + (h + 1) * dh]          # [S, dh]
                v = qkv_bf[lo:lo + S, 2 * H + h * dh:2 * H + (h + 1) * dh]  # [S, dh]
                # scores = q @ k^T (1/sqrt(dh) folded into Wq); f32 accumulate
                s = lax.dot_general(q, k, (((1,), (1,)), ((), ())),
                                    preferred_element_type=f32)             # [S, S]
                s = s + kbias                                   # mask broadcast in-kernel
                m = jnp.max(s, axis=-1, keepdims=True)
                p = jnp.exp(s - m)
                p = p * pl.reciprocal(jnp.sum(p, axis=-1, keepdims=True), approx=True)
                head_ctx.append(jnp.dot(p.astype(bf16), v,
                                        preferred_element_type=f32))        # [S, dh]
            row_ctx.append(jnp.concatenate(head_ctx, axis=-1))              # [S, H]
        ctx = jnp.concatenate(row_ctx, axis=0) if rows > 1 else row_ctx[0]  # [rows*S, H]

        # ----- merged output projection (single [H,H] matmul) + residual + LN -----
        attn = jnp.dot(ctx.astype(bf16), wo_ref[l], preferred_element_type=f32) + bo_ref[l]
        x = layernorm(attn + x, g1_ref[l], b1_ref[l])

        # ----- FFN -----
        x_bf = x.astype(bf16)
        ffn = jnp.dot(x_bf, wi_ref[l], preferred_element_type=f32) + bi_ref[l]
        # TODO(synk): HF BERT uses exact erf-based GELU; tanh approximation used here.
        c0 = 0.7978845608028654  # sqrt(2/pi)
        ffn = 0.5 * ffn * (1.0 + jnp.tanh(c0 * (ffn + 0.044715 * ffn * ffn * ffn)))
        ffn_out = jnp.dot(ffn.astype(bf16), wo2_ref[l],
                          preferred_element_type=f32) + bo2_ref[l]
        x = layernorm(ffn_out + x, g2_ref[l], b2_ref[l])

    # ----- classifier (lane-dense padded output, unmasked stores) -----
    out_ref[...] = (jnp.dot(x.astype(bf16), cw_ref[...], preferred_element_type=f32)
                    + cb_ref[...]).astype(out_ref.dtype)


def encoder_classifier(x2d, key_bias, pk, cfg, batch_blocks):
    """x2d: [B*S, H] embedding sum. key_bias: [B, 1, S]. Returns padded logits [B*S, LANE]."""
    B = key_bias.shape[0]
    S = x2d.shape[0] // B
    H, I, nh, nL = cfg["hidden"], cfg["inter"], cfg["heads"], cfg["layers"]
    dh = H // nh
    qkvp = pk["wqkv"].shape[-1]
    rows = B // batch_blocks

    def const_spec(shape):
        n = len(shape)
        return pl.BlockSpec(shape, lambda b: (0,) * n)   # resident across the grid

    in_specs = [
        pl.BlockSpec((rows * S, H), lambda b: (b, 0)),       # this block's activation rows
        pl.BlockSpec((rows, 1, S), lambda b: (b, 0, 0)),     # this block's key-padding bias
        const_spec((1, H)), const_spec((1, H)),              # embedding LN gamma / beta
        const_spec((nL, H, qkvp)), const_spec((nL, 1, qkvp)),  # fused Wqkv, bqkv (padded)
        const_spec((nL, H, H)), const_spec((nL, 1, H)),        # Wo (merged), bo
        const_spec((nL, 1, H)), const_spec((nL, 1, H)),        # LN1 gamma / beta
        const_spec((nL, H, I)), const_spec((nL, 1, I)),        # Wi, bi
        const_spec((nL, I, H)), const_spec((nL, 1, H)),        # Wo2, bo2
        const_spec((nL, 1, H)), const_spec((nL, 1, H)),        # LN2 gamma / beta
        const_spec((H, LANE)), const_spec((1, LANE)),          # classifier (lane-padded)
    ]

    kernel = functools.partial(_encoder_kernel, num_layers=nL, num_heads=nh,
                               head_dim=dh, hidden=H, seq=S, rows=rows, eps=1e-12)
    return pl.pallas_call(
        kernel,
        out_shape=jax.ShapeDtypeStruct((B * S, LANE), jnp.float32),
        grid_spec=pltpu.PrefetchScalarGridSpec(
            num_scalar_prefetch=0,
            grid=(batch_blocks,),
            in_specs=in_specs,
            out_specs=pl.BlockSpec((rows * S, LANE), lambda b: (b, 0)),
        ),
        compiler_params=pltpu.CompilerParams(
            dimension_semantics=("parallel",),               # shard blocks across TCs (v7x)
            vmem_limit_bytes=32 * 1024 * 1024),
    )(x2d, key_bias,
      pk["emb_ln_g"], pk["emb_ln_b"],
      pk["wqkv"], pk["bqkv"], pk["wo"], pk["bo"], pk["ln1_g"], pk["ln1_b"],
      pk["wi"], pk["bi"], pk["wo2"], pk["bo2"], pk["ln2_g"], pk["ln2_b"],
      pk["cls_w"], pk["cls_b"])


def _num_batch_blocks(batch):
    """Grid blocks over batch: collapse to 1 on single-TC v5e/v6e, 2 on dual-TC v7x."""
    try:
        kind = jax.devices()[0].device_kind.lower()
    except Exception:
        kind = ""
    n_tc = 2 if ("v7" in kind or "7x" in kind) else 1
    n = max(min(n_tc, batch), 1)
    while batch % n:
        n -= 1
    return n


# ----------------------------- params & packing --------------------------------


def init_params(key, cfg):
    keys = iter(jax.random.split(key, 128))
    nxt = lambda: next(keys)
    std = 0.02
    H, I, L = cfg["hidden"], cfg["inter"], cfg["num_labels"]

    def dense(k, fan_in, fan_out):
        return jax.random.normal(k, (fan_in, fan_out), jnp.float32) * std

    params = {
        "word_emb": jax.random.normal(nxt(), (cfg["vocab"], H), jnp.float32) * std,
        "pos_emb": jax.random.normal(nxt(), (cfg["max_pos"], H), jnp.float32) * std,
        "type_emb": jax.random.normal(nxt(), (cfg["type_vocab"], H), jnp.float32) * std,
        "emb_ln_g": jnp.ones((H,), jnp.float32),
        "emb_ln_b": jnp.zeros((H,), jnp.float32),
        "layers": [],
        "cls_w": dense(nxt(), H, L),
        "cls_b": jnp.zeros((L,), jnp.float32),
        "crf_start": jax.random.normal(nxt(), (L,), jnp.float32) * 0.1,
        "crf_end": jax.random.normal(nxt(), (L,), jnp.float32) * 0.1,
        "crf_trans": jax.random.normal(nxt(), (L, L), jnp.float32) * 0.1,
    }
    for _ in range(cfg["layers"]):
        params["layers"].append({
            "wq": dense(nxt(), H, H), "bq": jnp.zeros((H,), jnp.float32),
            "wk": dense(nxt(), H, H), "bk": jnp.zeros((H,), jnp.float32),
            "wv": dense(nxt(), H, H), "bv": jnp.zeros((H,), jnp.float32),
            "wo": dense(nxt(), H, H), "bo": jnp.zeros((H,), jnp.float32),
            "ln1_g": jnp.ones((H,), jnp.float32), "ln1_b": jnp.zeros((H,), jnp.float32),
            "wi": dense(nxt(), H, I), "bi": jnp.zeros((I,), jnp.float32),
            "wo2": dense(nxt(), I, H), "bo2": jnp.zeros((H,), jnp.float32),
            "ln2_g": jnp.ones((H,), jnp.float32), "ln2_b": jnp.zeros((H,), jnp.float32),
        })
    return params


def pack_params(p, cfg):
    """Stack per-layer weights, fuse QKV (scale folded into Wq), bf16 matmul weights,
    lane-pad the fused-QKV and classifier slabs."""
    H, I, nh, Lb = cfg["hidden"], cfg["inter"], cfg["heads"], cfg["num_labels"]
    dh = H // nh
    scale = 1.0 / math.sqrt(dh)
    qkvp = pl.cdiv(3 * H, LANE) * LANE           # fused QKV width padded to 128 lanes
    bf16 = jnp.bfloat16
    layers = p["layers"]

    def fused_qkv_w(l):   # [H, 3H] -> lane-padded [H, qkvp]; 1/sqrt(dh) folded into Wq
        w = jnp.concatenate([l["wq"] * scale, l["wk"], l["wv"]], axis=1)
        return jnp.pad(w, ((0, 0), (0, qkvp - 3 * H)))

    def fused_qkv_b(l):
        b = jnp.concatenate([l["bq"] * scale, l["bk"], l["bv"]])
        return jnp.pad(b, (0, qkvp - 3 * H)).reshape(1, qkvp)

    cls_w_pad = jnp.zeros((H, LANE), jnp.float32).at[:, :Lb].set(p["cls_w"])
    cls_b_pad = jnp.zeros((1, LANE), jnp.float32).at[0, :Lb].set(p["cls_b"])

    return {
        "word_emb": p["word_emb"], "pos_emb": p["pos_emb"], "type_emb": p["type_emb"],
        "emb_ln_g": p["emb_ln_g"].reshape(1, H), "emb_ln_b": p["emb_ln_b"].reshape(1, H),
        "wqkv": jnp.stack([fused_qkv_w(l) for l in layers]).astype(bf16),
        "bqkv": jnp.stack([fused_qkv_b(l) for l in layers]),
        "wo": jnp.stack([l["wo"] for l in layers]).astype(bf16),
        "bo": jnp.stack([l["bo"].reshape(1, H) for l in layers]),
        "ln1_g": jnp.stack([l["ln1_g"].reshape(1, H) for l in layers]),
        "ln1_b": jnp.stack([l["ln1_b"].reshape(1, H) for l in layers]),
        "wi": jnp.stack([l["wi"] for l in layers]).astype(bf16),
        "bi": jnp.stack([l["bi"].reshape(1, I) for l in layers]),
        "wo2": jnp.stack([l["wo2"] for l in layers]).astype(bf16),
        "bo2": jnp.stack([l["bo2"].reshape(1, H) for l in layers]),
        "ln2_g": jnp.stack([l["ln2_g"].reshape(1, H) for l in layers]),
        "ln2_b": jnp.stack([l["ln2_b"].reshape(1, H) for l in layers]),
        "cls_w": cls_w_pad.astype(bf16),
        "cls_b": cls_b_pad,
        "crf_start": p["crf_start"], "crf_end": p["crf_end"], "crf_trans": p["crf_trans"],
    }


# ----------------------------- CRF decode (plain JAX) ---------------------------


def crf_decode(emissions, mask, start_t, end_t, trans):
    # Viterbi decode matching torchcrf.CRF.decode semantics (batch_first=True).
    # Sequential, data-dependent backtrace -> plain JAX (not the hot path).
    B, S, L = emissions.shape
    score0 = start_t[None, :] + emissions[:, 0]  # (B, L)

    def fwd(score, inp):
        emit_t, mask_t = inp
        nxt = score[:, :, None] + trans[None] + emit_t[:, None, :]  # (B, Lfrom, Lto)
        best = jnp.max(nxt, axis=1)
        idx = jnp.argmax(nxt, axis=1)
        score_new = jnp.where(mask_t[:, None], best, score)
        return score_new, idx

    final_score, history = lax.scan(
        fwd, score0,
        (jnp.swapaxes(emissions[:, 1:], 0, 1), jnp.swapaxes(mask[:, 1:], 0, 1)))
    final_score = final_score + end_t[None, :]
    last_best = jnp.argmax(final_score, axis=-1)  # (B,)

    def bwd(cur_tag, inp):
        hist_t, mask_tp1 = inp  # (B, L), (B,)
        prev_from_hist = jnp.take_along_axis(hist_t, cur_tag[:, None], axis=1)[:, 0]
        prev = jnp.where(mask_tp1, prev_from_hist, last_best)
        return prev, prev

    _, tags_rev = lax.scan(
        bwd, last_best,
        (history[::-1], jnp.swapaxes(mask[:, 1:], 0, 1)[::-1]))
    tags = jnp.concatenate([tags_rev[::-1], last_best[None]], axis=0)  # (S, B)
    return jnp.transpose(tags, (1, 0)).astype(jnp.int32)  # (B, S)


# ----------------------------- forward (glue) -----------------------------------


def bert_for_ner_forward(packed, input_ids, attention_mask, cfg=CFG, batch_blocks=1):
    B, S = input_ids.shape
    H, Lb = cfg["hidden"], cfg["num_labels"]

    # Embedding lookup (gather) stays in JAX; LayerNorm happens inside the fused kernel.
    # TODO(synk): token_type_ids hard-coded to segment 0 (module never passes segments).
    x = (packed["word_emb"][input_ids]
         + packed["pos_emb"][:S][None, :, :]
         + packed["type_emb"][0][None, None, :]).astype(jnp.float32)
    x2d = x.reshape(B * S, H)

    # Tiny [B, 1, S] additive key-padding bias; broadcast to [S, S] inside the kernel.
    key_bias = ((1.0 - attention_mask.astype(jnp.float32)) * -1e9)[:, None, :]

    logits_pad = encoder_classifier(x2d, key_bias, packed, cfg, batch_blocks)  # [B*S, 128]
    logits = logits_pad[:, :Lb].reshape(B, S, Lb)

    # dropout is identity in eval mode
    preds = crf_decode(logits, attention_mask.astype(bool),
                       packed["crf_start"], packed["crf_end"], packed["crf_trans"])
    # Padded positions are zeroed; downstream must use the mask (tag 0 is also a label).
    return preds * attention_mask.astype(jnp.int32)
    # TODO(synk): training path (CRF negative log-likelihood loss) not implemented.


# --------------------------------- main ------------------------------------------

if __name__ == "__main__":
    key = jax.random.PRNGKey(0)
    pkey, dkey = jax.random.split(key)
    params = init_params(pkey, CFG)
    packed = pack_params(params, CFG)

    B, S = 2, 8
    input_ids = jax.random.randint(dkey, (B, S), 0, CFG["vocab"], dtype=jnp.int32)
    attention_mask = jnp.array([[1, 1, 1, 1, 1, 1, 1, 1],
                                [1, 1, 1, 1, 1, 0, 0, 0]], dtype=jnp.int32)

    batch_blocks = _num_batch_blocks(B)   # 1 on v5e/v6e (single TC), 2 on v7x (dual TC)
    fwd = jax.jit(functools.partial(bert_for_ner_forward, cfg=CFG,
                                    batch_blocks=batch_blocks))
    preds = fwd(packed, input_ids, attention_mask)
    jax.block_until_ready(preds)

    assert preds.shape == (B, S) and preds.dtype == jnp.int32
    print("KERNEL_OK")
</pallas_src>

<mosaic_0001>
module attributes {stable_mosaic.version = 11 : i64} {
  func.func @_encoder_kernel(%arg0: i32, %arg1: memref<16x32xf32, #tpu.memory_space<vmem>>, %arg2: memref<2x1x8xf32, #tpu.memory_space<vmem>>, %arg3: memref<1x32xf32, #tpu.memory_space<vmem>>, %arg4: memref<1x32xf32, #tpu.memory_space<vmem>>, %arg5: memref<2x32x128xbf16, #tpu.memory_space<vmem>>, %arg6: memref<2x1x128xf32, #tpu.memory_space<vmem>>, %arg7: memref<2x32x32xbf16, #tpu.memory_space<vmem>>, %arg8: memref<2x1x32xf32, #tpu.memory_space<vmem>>, %arg9: memref<2x1x32xf32, #tpu.memory_space<vmem>>, %arg10: memref<2x1x32xf32, #tpu.memory_space<vmem>>, %arg11: memref<2x32x64xbf16, #tpu.memory_space<vmem>>, %arg12: memref<2x1x64xf32, #tpu.memory_space<vmem>>, %arg13: memref<2x64x32xbf16, #tpu.memory_space<vmem>>, %arg14: memref<2x1x32xf32, #tpu.memory_space<vmem>>, %arg15: memref<2x1x32xf32, #tpu.memory_space<vmem>>, %arg16: memref<2x1x32xf32, #tpu.memory_space<vmem>>, %arg17: memref<32x128xbf16, #tpu.memory_space<vmem>>, %arg18: memref<1x128xf32, #tpu.memory_space<vmem>>, %arg19: memref<16x128xf32, #tpu.memory_space<vmem>>) attributes {dimension_semantics = [#tpu.dimension_semantics<parallel>], iteration_bounds = array<i64: 1>, scalar_prefetch = 0 : i64, scratch_operands = 0 : i64, tpu.core_type = #tpu.core_type<tc>, window_params = [{transform_indices = @transform_0, window_bounds = array<i64: 16, 32>}, {transform_indices = @transform_1, window_bounds = array<i64: 2, 1, 8>}, {pipeline_mode = #tpu.pipeline_mode<synchronous>, transform_indices = @transform_2, window_bounds = array<i64: 1, 32>}, {pipeline_mode = #tpu.pipeline_mode<synchronous>, transform_indices = @transform_3, window_bounds = array<i64: 1, 32>}, {pipeline_mode = #tpu.pipeline_mode<synchronous>, transform_indices = @transform_4, window_bounds = array<i64: 2, 32, 128>}, {pipeline_mode = #tpu.pipeline_mode<synchronous>, transform_indices = @transform_5, window_bounds = array<i64: 2, 1, 128>}, {pipeline_mode = #tpu.pipeline_mode<synchronous>, transform_indices = @transform_6, window_bounds = array<i64: 2, 32, 32>}, {pipeline_mode = #tpu.pipeline_mode<synchronous>, transform_indices = @transform_7, window_bounds = array<i64: 2, 1, 32>}, {pipeline_mode = #tpu.pipeline_mode<synchronous>, transform_indices = @transform_8, window_bounds = array<i64: 2, 1, 32>}, {pipeline_mode = #tpu.pipeline_mode<synchronous>, transform_indices = @transform_9, window_bounds = array<i64: 2, 1, 32>}, {pipeline_mode = #tpu.pipeline_mode<synchronous>, transform_indices = @transform_10, window_bounds = array<i64: 2, 32, 64>}, {pipeline_mode = #tpu.pipeline_mode<synchronous>, transform_indices = @transform_11, window_bounds = array<i64: 2, 1, 64>}, {pipeline_mode = #tpu.pipeline_mode<synchronous>, transform_indices = @transform_12, window_bounds = array<i64: 2, 64, 32>}, {pipeline_mode = #tpu.pipeline_mode<synchronous>, transform_indices = @transform_13, window_bounds = array<i64: 2, 1, 32>}, {pipeline_mode = #tpu.pipeline_mode<synchronous>, transform_indices = @transform_14, window_bounds = array<i64: 2, 1, 32>}, {pipeline_mode = #tpu.pipeline_mode<synchronous>, transform_indices = @transform_15, window_bounds = array<i64: 2, 1, 32>}, {pipeline_mode = #tpu.pipeline_mode<synchronous>, transform_indices = @transform_16, window_bounds = array<i64: 32, 128>}, {pipeline_mode = #tpu.pipeline_mode<synchronous>, transform_indices = @transform_17, window_bounds = array<i64: 1, 128>}, {transform_indices = @transform_18, window_bounds = array<i64: 16, 128>}]} {
    %c0 = arith.constant 0 : index
    %c0_0 = arith.constant 0 : index
    %0 = vector.load %arg1[%c0, %c0_0] : memref<16x32xf32, #tpu.memory_space<vmem>>, vector<16x32xf32>
    %c0_1 = arith.constant 0 : index
    %c0_2 = arith.constant 0 : index
    %1 = vector.load %arg3[%c0_1, %c0_2] : memref<1x32xf32, #tpu.memory_space<vmem>>, vector<1x32xf32>
    %c0_3 = arith.constant 0 : index
    %c0_4 = arith.constant 0 : index
    %2 = vector.load %arg4[%c0_3, %c0_4] : memref<1x32xf32, #tpu.memory_space<vmem>>, vector<1x32xf32>
    %cst = arith.constant dense<0.000000e+00> : vector<16xf32>
    %3 = vector.multi_reduction <add>, %0, %cst [1] : vector<16x32xf32> to vector<16xf32>
    %4 = vector.shape_cast %3 : vector<16xf32> to vector<16x1xf32>
    %cst_5 = arith.constant 3.200000e+01 : f32
    %5 = vector.broadcast %cst_5 : f32 to vector<16x1xf32>
    %6 = arith.divf %4, %5 : vector<16x1xf32>
    %7 = vector.broadcast %6 : vector<16x1xf32> to vector<16x32xf32>
    %8 = arith.subf %0, %7 : vector<16x32xf32>
    %9 = arith.mulf %8, %8 : vector<16x32xf32>
    %cst_6 = arith.constant dense<0.000000e+00> : vector<16xf32>
    %10 = vector.multi_reduction <add>, %9, %cst_6 [1] : vector<16x32xf32> to vector<16xf32>
    %11 = vector.shape_cast %10 : vector<16xf32> to vector<16x1xf32>
    %cst_7 = arith.constant 3.200000e+01 : f32
    %12 = vector.broadcast %cst_7 : f32 to vector<16x1xf32>
    %13 = arith.divf %11, %12 : vector<16x1xf32>
    %cst_8 = arith.constant 9.99999996E-13 : f32
    %14 = vector.broadcast %cst_8 : f32 to vector<16x1xf32>
    %15 = arith.addf %13, %14 : vector<16x1xf32>
    %16 = math.rsqrt %15 : vector<16x1xf32>
    %17 = vector.broadcast %16 : vector<16x1xf32> to vector<16x32xf32>
    %18 = arith.mulf %8, %17 : vector<16x32xf32>
    %19 = vector.broadcast %1 : vector<1x32xf32> to vector<16x32xf32>
    %20 = arith.mulf %18, %19 : vector<16x32xf32>
    %21 = vector.broadcast %2 : vector<1x32xf32> to vector<16x32xf32>
    %22 = arith.addf %20, %21 : vector<16x32xf32>
    %23 = arith.truncf %22 : vector<16x32xf32> to vector<16x32xbf16>
    %c0_9 = arith.constant 0 : index
    %c0_10 = arith.constant 0 : index
    %c0_11 = arith.constant 0 : index
    %24 = vector.load %arg5[%c0_9, %c0_10, %c0_11] : memref<2x32x128xbf16, #tpu.memory_space<vmem>>, vector<1x32x128xbf16>
    %25 = vector.shape_cast %24 : vector<1x32x128xbf16> to vector<32x128xbf16>
    %cst_12 = arith.constant dense<0.000000e+00> : vector<16x128xf32>
    %26 = tpu.matmul %23, %25, %cst_12 {dimension_numbers = #tpu.dot_dimension_numbers<[1], [0], [0], [1], [0, 0, 1, 1], [], []>} : vector<16x32xbf16>, vector<32x128xbf16>, vector<16x128xf32> -> vector<16x128xf32>
    %c0_13 = arith.constant 0 : index
    %c0_14 = arith.constant 0 : index
    %c0_15 = arith.constant 0 : index
    %27 = vector.load %arg6[%c0_13, %c0_14, %c0_15] : memref<2x1x128xf32, #tpu.memory_space<vmem>>, vector<1x1x128xf32>
    %28 = vector.shape_cast %27 : vector<1x1x128xf32> to vector<1x128xf32>
    %29 = vector.broadcast %28 : vector<1x128xf32> to vector<16x128xf32>
    %30 = arith.addf %26, %29 : vector<16x128xf32>
    %31 = arith.truncf %30 : vector<16x128xf32> to vector<16x128xbf16>
    %c0_16 = arith.constant 0 : index
    %c0_17 = arith.constant 0 : index
    %c0_18 = arith.constant 0 : index
    %32 = vector.load %arg2[%c0_16, %c0_17, %c0_18] : memref<2x1x8xf32, #tpu.memory_space<vmem>>, vector<1x1x8xf32>
    %33 = vector.shape_cast %32 : vector<1x1x8xf32> to vector<1x8xf32>
    %34 = vector.extract_strided_slice %31 {offsets = [0, 0], sizes = [8, 16], strides = [1, 1]} : vector<16x128xbf16> to vector<8x16xbf16>
    %35 = vector.extract_strided_slice %31 {offsets = [0, 32], sizes = [8, 16], strides = [1, 1]} : vector<16x128xbf16> to vector<8x16xbf16>
    %36 = vector.extract_strided_slice %31 {offsets = [0, 64], sizes = [8, 16], strides = [1, 1]} : vector<16x128xbf16> to vector<8x16xbf16>
    %cst_19 = arith.constant dense<0.000000e+00> : vector<8x8xf32>
    %37 = tpu.matmul %34, %35, %cst_19 {dimension_numbers = #tpu.dot_dimension_numbers<[1], [1], [0], [0], [0, 0, 1, 0], [], []>} : vector<8x16xbf16>, vector<8x16xbf16>, vector<8x8xf32> -> vector<8x8xf32>
    %38 = vector.broadcast %33 : vector<1x8xf32> to vector<8x8xf32>
    %39 = arith.addf %37, %38 : vector<8x8xf32>
    %cst_20 = arith.constant dense<0xFF800000> : vector<8xf32>
    %40 = vector.multi_reduction <maximumf>, %39, %cst_20 [1] : vector<8x8xf32> to vector<8xf32>
    %41 = vector.shape_cast %40 : vector<8xf32> to vector<8x1xf32>
    %42 = vector.broadcast %41 : vector<8x1xf32> to vector<8x8xf32>
    %43 = arith.subf %39, %42 : vector<8x8xf32>
    %44 = math.exp %43 : vector<8x8xf32>
    %cst_21 = arith.constant dense<0.000000e+00> : vector<8xf32>
    %45 = vector.multi_reduction <add>, %44, %cst_21 [1] : vector<8x8xf32> to vector<8xf32>
    %46 = vector.shape_cast %45 : vector<8xf32> to vector<8x1xf32>
    %47 = tpu.reciprocal %46 {approx = true} : vector<8x1xf32> -> vector<8x1xf32>
    %48 = vector.broadcast %47 : vector<8x1xf32> to vector<8x8xf32>
    %49 = arith.mulf %44, %48 : vector<8x8xf32>
    %50 = arith.truncf %49 : vector<8x8xf32> to vector<8x8xbf16>
    %cst_22 = arith.constant dense<0.000000e+00> : vector<8x16xf32>
    %51 = tpu.matmul %50, %36, %cst_22 {dimension_numbers = #tpu.dot_dimension_numbers<[1], [0], [0], [1], [0, 0, 1, 1], [], []>} : vector<8x8xbf16>, vector<8x16xbf16>, vector<8x16xf32> -> vector<8x16xf32>
    %52 = vector.extract_strided_slice %31 {offsets = [0, 16], sizes = [8, 16], strides = [1, 1]} : vector<16x128xbf16> to vector<8x16xbf16>
    %53 = vector.extract_strided_slice %31 {offsets = [0, 48], sizes = [8, 16], strides = [1, 1]} : vector<16x128xbf16> to vector<8x16xbf16>
    %54 = vector.extract_strided_slice %31 {offsets = [0, 80], sizes = [8, 16], strides = [1, 1]} : vector<16x128xbf16> to vector<8x16xbf16>
    %cst_23 = arith.constant dense<0.000000e+00> : vector<8x8xf32>
    %55 = tpu.matmul %52, %53, %cst_23 {dimension_numbers = #tpu.dot_dimension_numbers<[1], [1], [0], [0], [0, 0, 1, 0], [], []>} : vector<8x16xbf16>, vector<8x16xbf16>, vector<8x8xf32> -> vector<8x8xf32>
    %56 = vector.broadcast %33 : vector<1x8xf32> to vector<8x8xf32>
    %57 = arith.addf %55, %56 : vector<8x8xf32>
    %cst_24 = arith.constant dense<0xFF800000> : vector<8xf32>
    %58 = vector.multi_reduction <maximumf>, %57, %cst_24 [1] : vector<8x8xf32> to vector<8xf32>
    %59 = vector.shape_cast %58 : vector<8xf32> to vector<8x1xf32>
    %60 = vector.broadcast %59 : vector<8x1xf32> to vector<8x8xf32>
    %61 = arith.subf %57, %60 : vector<8x8xf32>
    %62 = math.exp %61 : vector<8x8xf32>
    %cst_25 = arith.constant dense<0.000000e+00> : vector<8xf32>
    %63 = vector.multi_reduction <add>, %62, %cst_25 [1] : vector<8x8xf32> to vector<8xf32>
    %64 = vector.shape_cast %63 : vector<8xf32> to vector<8x1xf32>
    %65 = tpu.reciprocal %64 {approx = true} : vector<8x1xf32> -> vector<8x1xf32>
    %66 = vector.broadcast %65 : vector<8x1xf32> to vector<8x8xf32>
    %67 = arith.mulf %62, %66 : vector<8x8xf32>
    %68 = arith.truncf %67 : vector<8x8xf32> to vector<8x8xbf16>
    %cst_26 = arith.constant dense<0.000000e+00> : vector<8x16xf32>
    %69 = tpu.matmul %68, %54, %cst_26 {dimension_numbers = #tpu.dot_dimension_numbers<[1], [0], [0], [1], [0, 0, 1, 1], [], []>} : vector<8x8xbf16>, vector<8x16xbf16>, vector<8x16xf32> -> vector<8x16xf32>
    %70 = tpu.concatenate %51, %69 in 1 : vector<8x16xf32>, vector<8x16xf32> -> vector<8x32xf32>
    %c1 = arith.constant 1 : index
    %c0_27 = arith.constant 0 : index
    %c0_28 = arith.constant 0 : index
    %71 = vector.load %arg2[%c1, %c0_27, %c0_28] : memref<2x1x8xf32, #tpu.memory_space<vmem>>, vector<1x1x8xf32>
    %72 = vector.shape_cast %71 : vector<1x1x8xf32> to vector<1x8xf32>
    %73 = vector.extract_strided_slice %31 {offsets = [8, 0], sizes = [8, 16], strides = [1, 1]} : vector<16x128xbf16> to vector<8x16xbf16>
    %74 = vector.extract_strided_slice %31 {offsets = [8, 32], sizes = [8, 16], strides = [1, 1]} : vector<16x128xbf16> to vector<8x16xbf16>
    %75 = vector.extract_strided_slice %31 {offsets = [8, 64], sizes = [8, 16], strides = [1, 1]} : vector<16x128xbf16> to vector<8x16xbf16>
    %cst_29 = arith.constant dense<0.000000e+00> : vector<8x8xf32>
    %76 = tpu.matmul %73, %74, %cst_29 {dimension_numbers = #tpu.dot_dimension_numbers<[1], [1], [0], [0], [0, 0, 1, 0], [], []>} : vector<8x16xbf16>, vector<8x16xbf16>, vector<8x8xf32> -> vector<8x8xf32>
    %77 = vector.broadcast %72 : vector<1x8xf32> to vector<8x8xf32>
    %78 = arith.addf %76, %77 : vector<8x8xf32>
    %cst_30 = arith.constant dense<0xFF800000> : vector<8xf32>
    %79 = vector.multi_reduction <maximumf>, %78, %cst_30 [1] : vector<8x8xf32> to vector<8xf32>
    %80 = vector.shape_cast %79 : vector<8xf32> to vector<8x1xf32>
    %81 = vector.broadcast %80 : vector<8x1xf32> to vector<8x8xf32>
    %82 = arith.subf %78, %81 : vector<8x8xf32>
    %83 = math.exp %82 : vector<8x8xf32>
    %cst_31 = arith.constant dense<0.000000e+00> : vector<8xf32>
    %84 = vector.multi_reduction <add>, %83, %cst_31 [1] : vector<8x8xf32> to vector<8xf32>
    %85 = vector.shape_cast %84 : vector<8xf32> to vector<8x1xf32>
    %86 = tpu.reciprocal %85 {approx = true} : vector<8x1xf32> -> vector<8x1xf32>
    %87 = vector.broadcast %86 : vector<8x1xf32> to vector<8x8xf32>
    %88 = arith.mulf %83, %87 : vector<8x8xf32>
    %89 = arith.truncf %88 : vector<8x8xf32> to vector<8x8xbf16>
    %cst_32 = arith.constant dense<0.000000e+00> : vector<8x16xf32>
    %90 = tpu.matmul %89, %75, %cst_32 {dimension_numbers = #tpu.dot_dimension_numbers<[1], [0], [0], [1], [0, 0, 1, 1], [], []>} : vector<8x8xbf16>, vector<8x16xbf16>, vector<8x16xf32> -> vector<8x16xf32>
    %91 = vector.extract_strided_slice %31 {offsets = [8, 16], sizes = [8, 16], strides = [1, 1]} : vector<16x128xbf16> to vector<8x16xbf16>
    %92 = vector.extract_strided_slice %31 {offsets = [8, 48], sizes = [8, 16], strides = [1, 1]} : vector<16x128xbf16> to vector<8x16xbf16>
    %93 = vector.extract_strided_slice %31 {offsets = [8, 80], sizes = [8, 16], strides = [1, 1]} : vector<16x128xbf16> to vector<8x16xbf16>
    %cst_33 = arith.constant dense<0.000000e+00> : vector<8x8xf32>
    %94 = tpu.matmul %91, %92, %cst_33 {dimension_numbers = #tpu.dot_dimension_numbers<[1], [1], [0], [0], [0, 0, 1, 0], [], []>} : vector<8x16xbf16>, vector<8x16xbf16>, vector<8x8xf32> -> vector<8x8xf32>
    %95 = vector.broadcast %72 : vector<1x8xf32> to vector<8x8xf32>
    %96 = arith.addf %94, %95 : vector<8x8xf32>
    %cst_34 = arith.constant dense<0xFF800000> : vector<8xf32>
    %97 = vector.multi_reduction <maximumf>, %96, %cst_34 [1] : vector<8x8xf32> to vector<8xf32>
    %98 = vector.shape_cast %97 : vector<8xf32> to vector<8x1xf32>
    %99 = vector.broadcast %98 : vector<8x1xf32> to vector<8x8xf32>
    %100 = arith.subf %96, %99 : vector<8x8xf32>
    %101 = math.exp %100 : vector<8x8xf32>
    %cst_35 = arith.constant dense<0.000000e+00> : vector<8xf32>
    %102 = vector.multi_reduction <add>, %101, %cst_35 [1] : vector<8x8xf32> to vector<8xf32>
    %103 = vector.shape_cast %102 : vector<8xf32> to vector<8x1xf32>
    %104 = tpu.reciprocal %103 {approx = true} : vector<8x1xf32> -> vector<8x1xf32>
    %105 = vector.broadcast %104 : vector<8x1xf32> to vector<8x8xf32>
    %106 = arith.mulf %101, %105 : vector<8x8xf32>
    %107 = arith.truncf %106 : vector<8x8xf32> to vector<8x8xbf16>
    %cst_36 = arith.constant dense<0.000000e+00> : vector<8x16xf32>
    %108 = tpu.matmul %107, %93, %cst_36 {dimension_numbers = #tpu.dot_dimension_numbers<[1], [0], [0], [1], [0, 0, 1, 1], [], []>} : vector<8x8xbf16>, vector<8x16xbf16>, vector<8x16xf32> -> vector<8x16xf32>
    %109 = tpu.concatenate %90, %108 in 1 : vector<8x16xf32>, vector<8x16xf32> -> vector<8x32xf32>
    %110 = tpu.concatenate %70, %109 in 0 : vector<8x32xf32>, vector<8x32xf32> -> vector<16x32xf32>
    %111 = arith.truncf %110 : vector<16x32xf32> to vector<16x32xbf16>
    %c0_37 = arith.constant 0 : index
    %c0_38 = arith.constant 0 : index
    %c0_39 = arith.constant 0 : index
    %112 = vector.load %arg7[%c0_37, %c0_38, %c0_39] : memref<2x32x32xbf16, #tpu.memory_space<vmem>>, vector<1x32x32xbf16>
    %113 = vector.shape_cast %112 : vector<1x32x32xbf16> to vector<32x32xbf16>
    %cst_40 = arith.constant dense<0.000000e+00> : vector<16x32xf32>
    %114 = tpu.matmul %111, %113, %cst_40 {dimension_numbers = #tpu.dot_dimension_numbers<[1], [0], [0], [1], [0, 0, 1, 1], [], []>} : vector<16x32xbf16>, vector<32x32xbf16>, vector<16x32xf32> -> vector<16x32xf32>
    %c0_41 = arith.constant 0 : index
    %c0_42 = arith.constant 0 : index
    %c0_43 = arith.constant 0 : index
    %115 = vector.load %arg8[%c0_41, %c0_42, %c0_43] : memref<2x1x32xf32, #tpu.memory_space<vmem>>, vector<1x1x32xf32>
    %116 = vector.shape_cast %115 : vector<1x1x32xf32> to vector<1x32xf32>
    %117 = vector.broadcast %116 : vector<1x32xf32> to vector<16x32xf32>
    %118 = arith.addf %114, %117 : vector<16x32xf32>
    %119 = arith.addf %118, %22 : vector<16x32xf32>
    %c0_44 = arith.constant 0 : index
    %c0_45 = arith.constant 0 : index
    %c0_46 = arith.constant 0 : index
    %120 = vector.load %arg9[%c0_44, %c0_45, %c0_46] : memref<2x1x32xf32, #tpu.memory_space<vmem>>, vector<1x1x32xf32>
    %121 = vector.shape_cast %120 : vector<1x1x32xf32> to vector<1x32xf32>
    %c0_47 = arith.constant 0 : index
    %c0_48 = arith.constant 0 : index
    %c0_49 = arith.constant 0 : index
    %122 = vector.load %arg10[%c0_47, %c0_48, %c0_49] : memref<2x1x32xf32, #tpu.memory_space<vmem>>, vector<1x1x32xf32>
    %123 = vector.shape_cast %122 : vector<1x1x32xf32> to vector<1x32xf32>
    %cst_50 = arith.constant dense<0.000000e+00> : vector<16xf32>
    %124 = vector.multi_reduction <add>, %119, %cst_50 [1] : vector<16x32xf32> to vector<16xf32>
    %125 = vector.shape_cast %124 : vector<16xf32> to vector<16x1xf32>
    %cst_51 = arith.constant 3.200000e+01 : f32
    %126 = vector.broadcast %cst_51 : f32 to vector<16x1xf32>
    %127 = arith.divf %125, %126 : vector<16x1xf32>
    %128 = vector.broadcast %127 : vector<16x1xf32> to vector<16x32xf32>
    %129 = arith.subf %119, %128 : vector<16x32xf32>
    %130 = arith.mulf %129, %129 : vector<16x32xf32>
    %cst_52 = arith.constant dense<0.000000e+00> : vector<16xf32>
    %131 = vector.multi_reduction <add>, %130, %cst_52 [1] : vector<16x32xf32> to vector<16xf32>
    %132 = vector.shape_cast %131 : vector<16xf32> to vector<16x1xf32>
    %cst_53 = arith.constant 3.200000e+01 : f32
    %133 = vector.broadcast %cst_53 : f32 to vector<16x1xf32>
    %134 = arith.divf %132, %133 : vector<16x1xf32>
    %cst_54 = arith.constant 9.99999996E-13 : f32
    %135 = vector.broadcast %cst_54 : f32 to vector<16x1xf32>
    %136 = arith.addf %134, %135 : vector<16x1xf32>
    %137 = math.rsqrt %136 : vector<16x1xf32>
    %138 = vector.broadcast %137 : vector<16x1xf32> to vector<16x32xf32>
    %139 = arith.mulf %129, %138 : vector<16x32xf32>
    %140 = vector.broadcast %121 : vector<1x32xf32> to vector<16x32xf32>
    %141 = arith.mulf %139, %140 : vector<16x32xf32>
    %142 = vector.broadcast %123 : vector<1x32xf32> to vector<16x32xf32>
    %143 = arith.addf %141, %142 : vector<16x32xf32>
    %144 = arith.truncf %143 : vector<16x32xf32> to vector<16x32xbf16>
    %c0_55 = arith.constant 0 : index
    %c0_56 = arith.constant 0 : index
    %c0_57 = arith.constant 0 : index
    %145 = vector.load %arg11[%c0_55, %c0_56, %c0_57] : memref<2x32x64xbf16, #tpu.memory_space<vmem>>, vector<1x32x64xbf16>
    %146 = vector.shape_cast %145 : vector<1x32x64xbf16> to vector<32x64xbf16>
    %cst_58 = arith.constant dense<0.000000e+00> : vector<16x64xf32>
    %147 = tpu.matmul %144, %146, %cst_58 {dimension_numbers = #tpu.dot_dimension_numbers<[1], [0], [0], [1], [0, 0, 1, 1], [], []>} : vector<16x32xbf16>, vector<32x64xbf16>, vector<16x64xf32> -> vector<16x64xf32>
    %c0_59 = arith.constant 0 : index
    %c0_60 = arith.constant 0 : index
    %c0_61 = arith.constant 0 : index
    %148 = vector.load %arg12[%c0_59, %c0_60, %c0_61] : memref<2x1x64xf32, #tpu.memory_space<vmem>>, vector<1x1x64xf32>
    %149 = vector.shape_cast %148 : vector<1x1x64xf32> to vector<1x64xf32>
    %150 = vector.broadcast %149 : vector<1x64xf32> to vector<16x64xf32>
    %151 = arith.addf %147, %150 : vector<16x64xf32>
    %cst_62 = arith.constant 5.000000e-01 : f32
    %152 = vector.broadcast %cst_62 : f32 to vector<16x64xf32>
    %153 = arith.mulf %152, %151 : vector<16x64xf32>
    %cst_63 = arith.constant 4.471500e-02 : f32
    %154 = vector.broadcast %cst_63 : f32 to vector<16x64xf32>
    %155 = arith.mulf %154, %151 : vector<16x64xf32>
    %156 = arith.mulf %155, %151 : vector<16x64xf32>
    %157 = arith.mulf %156, %151 : vector<16x64xf32>
    %158 = arith.addf %151, %157 : vector<16x64xf32>
    %cst_64 = arith.constant 0.797884583 : f32
    %159 = vector.broadcast %cst_64 : f32 to vector<16x64xf32>
    %160 = arith.mulf %159, %158 : vector<16x64xf32>
    %161 = math.tanh %160 : vector<16x64xf32>
    %cst_65 = arith.constant 1.000000e+00 : f32
    %162 = vector.broadcast %cst_65 : f32 to vector<16x64xf32>
    %163 = arith.addf %162, %161 : vector<16x64xf32>
    %164 = arith.mulf %153, %163 : vector<16x64xf32>
    %165 = arith.truncf %164 : vector<16x64xf32> to vector<16x64xbf16>
    %c0_66 = arith.constant 0 : index
    %c0_67 = arith.constant 0 : index
    %c0_68 = arith.constant 0 : index
    %166 = vector.load %arg13[%c0_66, %c0_67, %c0_68] : memref<2x64x32xbf16, #tpu.memory_space<vmem>>, vector<1x64x32xbf16>
    %167 = vector.shape_cast %166 : vector<1x64x32xbf16> to vector<64x32xbf16>
    %cst_69 = arith.constant dense<0.000000e+00> : vector<16x32xf32>
    %168 = tpu.matmul %165, %167, %cst_69 {dimension_numbers = #tpu.dot_dimension_numbers<[1], [0], [0], [1], [0, 0, 1, 1], [], []>} : vector<16x64xbf16>, vector<64x32xbf16>, vector<16x32xf32> -> vector<16x32xf32>
    %c0_70 = arith.constant 0 : index
    %c0_71 = arith.constant 0 : index
    %c0_72 = arith.constant 0 : index
    %169 = vector.load %arg14[%c0_70, %c0_71, %c0_72] : memref<2x1x32xf32, #tpu.memory_space<vmem>>, vector<1x1x32xf32>
    %170 = vector.shape_cast %169 : vector<1x1x32xf32> to vector<1x32xf32>
    %171 = vector.broadcast %170 : vector<1x32xf32> to vector<16x32xf32>
    %172 = arith.addf %168, %171 : vector<16x32xf32>
    %173 = arith.addf %172, %143 : vector<16x32xf32>
    %c0_73 = arith.constant 0 : index
    %c0_74 = arith.constant 0 : index
    %c0_75 = arith.constant 0 : index
    %174 = vector.load %arg15[%c0_73, %c0_74, %c0_75] : memref<2x1x32xf32, #tpu.memory_space<vmem>>, vector<1x1x32xf32>
    %175 = vector.shape_cast %174 : vector<1x1x32xf32> to vector<1x32xf32>
    %c0_76 = arith.constant 0 : index
    %c0_77 = arith.constant 0 : index
    %c0_78 = arith.constant 0 : index
    %176 = vector.load %arg16[%c0_76, %c0_77, %c0_78] : memref<2x1x32xf32, #tpu.memory_space<vmem>>, vector<1x1x32xf32>
    %177 = vector.shape_cast %176 : vector<1x1x32xf32> to vector<1x32xf32>
    %cst_79 = arith.constant dense<0.000000e+00> : vector<16xf32>
    %178 = vector.multi_reduction <add>, %173, %cst_79 [1] : vector<16x32xf32> to vector<16xf32>
    %179 = vector.shape_cast %178 : vector<16xf32> to vector<16x1xf32>
    %cst_80 = arith.constant 3.200000e+01 : f32
    %180 = vector.broadcast %cst_80 : f32 to vector<16x1xf32>
    %181 = arith.divf %179, %180 : vector<16x1xf32>
    %182 = vector.broadcast %181 : vector<16x1xf32> to vector<16x32xf32>
    %183 = arith.subf %173, %182 : vector<16x32xf32>
    %184 = arith.mulf %183, %183 : vector<16x32xf32>
    %cst_81 = arith.constant dense<0.000000e+00> : vector<16xf32>
    %185 = vector.multi_reduction <add>, %184, %cst_81 [1] : vector<16x32xf32> to vector<16xf32>
    %186 = vector.shape_cast %185 : vector<16xf32> to vector<16x1xf32>
    %cst_82 = arith.constant 3.200000e+01 : f32
    %187 = vector.broadcast %cst_82 : f32 to vector<16x1xf32>
    %188 = arith.divf %186, %187 : vector<16x1xf32>
    %cst_83 = arith.constant 9.99999996E-13 : f32
    %189 = vector.broadcast %cst_83 : f32 to vector<16x1xf32>
    %190 = arith.addf %188, %189 : vector<16x1xf32>
    %191 = math.rsqrt %190 : vector<16x1xf32>
    %192 = vector.broadcast %191 : vector<16x1xf32> to vector<16x32xf32>
    %193 = arith.mulf %183, %192 : vector<16x32xf32>
    %194 = vector.broadcast %175 : vector<1x32xf32> to vector<16x32xf32>
    %195 = arith.mulf %193, %194 : vector<16x32xf32>
    %196 = vector.broadcast %177 : vector<1x32xf32> to vector<16x32xf32>
    %197 = arith.addf %195, %196 : vector<16x32xf32>
    %198 = arith.truncf %197 : vector<16x32xf32> to vector<16x32xbf16>
    %c1_84 = arith.constant 1 : index
    %c0_85 = arith.constant 0 : index
    %c0_86 = arith.constant 0 : index
    %199 = vector.load %arg5[%c1_84, %c0_85, %c0_86] : memref<2x32x128xbf16, #tpu.memory_space<vmem>>, vector<1x32x128xbf16>
    %200 = vector.shape_cast %199 : vector<1x32x128xbf16> to vector<32x128xbf16>
    %cst_87 = arith.constant dense<0.000000e+00> : vector<16x128xf32>
    %201 = tpu.matmul %198, %200, %cst_87 {dimension_numbers = #tpu.dot_dimension_numbers<[1], [0], [0], [1], [0, 0, 1, 1], [], []>} : vector<16x32xbf16>, vector<32x128xbf16>, vector<16x128xf32> -> vector<16x128xf32>
    %c1_88 = arith.constant 1 : index
    %c0_89 = arith.constant 0 : index
    %c0_90 = arith.constant 0 : index
    %202 = vector.load %arg6[%c1_88, %c0_89, %c0_90] : memref<2x1x128xf32, #tpu.memory_space<vmem>>, vector<1x1x128xf32>
    %203 = vector.shape_cast %202 : vector<1x1x128xf32> to vector<1x128xf32>
    %204 = vector.broadcast %203 : vector<1x128xf32> to vector<16x128xf32>
    %205 = arith.addf %201, %204 : vector<16x128xf32>
    %206 = arith.truncf %205 : vector<16x128xf32> to vector<16x128xbf16>
    %c0_91 = arith.constant 0 : index
    %c0_92 = arith.constant 0 : index
    %c0_93 = arith.constant 0 : index
    %207 = vector.load %arg2[%c0_91, %c0_92, %c0_93] : memref<2x1x8xf32, #tpu.memory_space<vmem>>, vector<1x1x8xf32>
    %208 = vector.shape_cast %207 : vector<1x1x8xf32> to vector<1x8xf32>
    %209 = vector.extract_strided_slice %206 {offsets = [0, 0], sizes = [8, 16], strides = [1, 1]} : vector<16x128xbf16> to vector<8x16xbf16>
    %210 = vector.extract_strided_slice %206 {offsets = [0, 32], sizes = [8, 16], strides = [1, 1]} : vector<16x128xbf16> to vector<8x16xbf16>
    %211 = vector.extract_strided_slice %206 {offsets = [0, 64], sizes = [8, 16], strides = [1, 1]} : vector<16x128xbf16> to vector<8x16xbf16>
    %cst_94 = arith.constant dense<0.000000e+00> : vector<8x8xf32>
    %212 = tpu.matmul %209, %210, %cst_94 {dimension_numbers = #tpu.dot_dimension_numbers<[1], [1], [0], [0], [0, 0, 1, 0], [], []>} : vector<8x16xbf16>, vector<8x16xbf16>, vector<8x8xf32> -> vector<8x8xf32>
    %213 = vector.broadcast %208 : vector<1x8xf32> to vector<8x8xf32>
    %214 = arith.addf %212, %213 : vector<8x8xf32>
    %cst_95 = arith.constant dense<0xFF800000> : vector<8xf32>
    %215 = vector.multi_reduction <maximumf>, %214, %cst_95 [1] : vector<8x8xf32> to vector<8xf32>
    %216 = vector.shape_cast %215 : vector<8xf32> to vector<8x1xf32>
    %217 = vector.broadcast %216 : vector<8x1xf32> to vector<8x8xf32>
    %218 = arith.subf %214, %217 : vector<8x8xf32>
    %219 = math.exp %218 : vector<8x8xf32>
    %cst_96 = arith.constant dense<0.000000e+00> : vector<8xf32>
    %220 = vector.multi_reduction <add>, %219, %cst_96 [1] : vector<8x8xf32> to vector<8xf32>
    %221 = vector.shape_cast %220 : vector<8xf32> to vector<8x1xf32>
    %222 = tpu.reciprocal %221 {approx = true} : vector<8x1xf32> -> vector<8x1xf32>
    %223 = vector.broadcast %222 : vector<8x1xf32> to vector<8x8xf32>
    %224 = arith.mulf %219, %223 : vector<8x8xf32>
    %225 = arith.truncf %224 : vector<8x8xf32> to vector<8x8xbf16>
    %cst_97 = arith.constant dense<0.000000e+00> : vector<8x16xf32>
    %226 = tpu.matmul %225, %211, %cst_97 {dimension_numbers = #tpu.dot_dimension_numbers<[1], [0], [0], [1], [0, 0, 1, 1], [], []>} : vector<8x8xbf16>, vector<8x16xbf16>, vector<8x16xf32> -> vector<8x16xf32>
    %227 = vector.extract_strided_slice %206 {offsets = [0, 16], sizes = [8, 16], strides = [1, 1]} : vector<16x128xbf16> to vector<8x16xbf16>
    %228 = vector.extract_strided_slice %206 {offsets = [0, 48], sizes = [8, 16], strides = [1, 1]} : vector<16x128xbf16> to vector<8x16xbf16>
    %229 = vector.extract_strided_slice %206 {offsets = [0, 80], sizes = [8, 16], strides = [1, 1]} : vector<16x128xbf16> to vector<8x16xbf16>
    %cst_98 = arith.constant dense<0.000000e+00> : vector<8x8xf32>
    %230 = tpu.matmul %227, %228, %cst_98 {dimension_numbers = #tpu.dot_dimension_numbers<[1], [1], [0], [0], [0, 0, 1, 0], [], []>} : vector<8x16xbf16>, vector<8x16xbf16>, vector<8x8xf32> -> vector<8x8xf32>
    %231 = vector.broadcast %208 : vector<1x8xf32> to vector<8x8xf32>
    %232 = arith.addf %230, %231 : vector<8x8xf32>
    %cst_99 = arith.constant dense<0xFF800000> : vector<8xf32>
    %233 = vector.multi_reduction <maximumf>, %232, %cst_99 [1] : vector<8x8xf32> to vector<8xf32>
    %234 = vector.shape_cast %233 : vector<8xf32> to vector<8x1xf32>
    %235 = vector.broadcast %234 : vector<8x1xf32> to vector<8x8xf32>
    %236 = arith.subf %232, %235 : vector<8x8xf32>
    %237 = math.exp %236 : vector<8x8xf32>
    %cst_100 = arith.constant dense<0.000000e+00> : vector<8xf32>
    %238 = vector.multi_reduction <add>, %237, %cst_100 [1] : vector<8x8xf32> to vector<8xf32>
    %239 = vector.shape_cast %238 : vector<8xf32> to vector<8x1xf32>
    %240 = tpu.reciprocal %239 {approx = true} : vector<8x1xf32> -> vector<8x1xf32>
    %241 = vector.broadcast %240 : vector<8x1xf32> to vector<8x8xf32>
    %242 = arith.mulf %237, %241 : vector<8x8xf32>
    %243 = arith.truncf %242 : vector<8x8xf32> to vector<8x8xbf16>
    %cst_101 = arith.constant dense<0.000000e+00> : vector<8x16xf32>
    %244 = tpu.matmul %243, %229, %cst_101 {dimension_numbers = #tpu.dot_dimension_numbers<[1], [0], [0], [1], [0, 0, 1, 1], [], []>} : vector<8x8xbf16>, vector<8x16xbf16>, vector<8x16xf32> -> vector<8x16xf32>
    %245 = tpu.concatenate %226, %244 in 1 : vector<8x16xf32>, vector<8x16xf32> -> vector<8x32xf32>
    %c1_102 = arith.constant 1 : index
    %c0_103 = arith.constant 0 : index
    %c0_104 = arith.constant 0 : index
    %246 = vector.load %arg2[%c1_102, %c0_103, %c0_104] : memref<2x1x8xf32, #tpu.memory_space<vmem>>, vector<1x1x8xf32>
    %247 = vector.shape_cast %246 : vector<1x1x8xf32> to vector<1x8xf32>
    %248 = vector.extract_strided_slice %206 {offsets = [8, 0], sizes = [8, 16], strides = [1, 1]} : vector<16x128xbf16> to vector<8x16xbf16>
    %249 = vector.extract_strided_slice %206 {offsets = [8, 32], sizes = [8, 16], strides = [1, 1]} : vector<16x128xbf16> to vector<8x16xbf16>
    %250 = vector.extract_strided_slice %206 {offsets = [8, 64], sizes = [8, 16], strides = [1, 1]} : vector<16x128xbf16> to vector<8x16xbf16>
    %cst_105 = arith.constant dense<0.000000e+00> : vector<8x8xf32>
    %251 = tpu.matmul %248, %249, %cst_105 {dimension_numbers = #tpu.dot_dimension_numbers<[1], [1], [0], [0], [0, 0, 1, 0], [], []>} : vector<8x16xbf16>, vector<8x16xbf16>, vector<8x8xf32> -> vector<8x8xf32>
    %252 = vector.broadcast %247 : vector<1x8xf32> to vector<8x8xf32>
    %253 = arith.addf %251, %252 : vector<8x8xf32>
    %cst_106 = arith.constant dense<0xFF800000> : vector<8xf32>
    %254 = vector.multi_reduction <maximumf>, %253, %cst_106 [1] : vector<8x8xf32> to vector<8xf32>
    %255 = vector.shape_cast %254 : vector<8xf32> to vector<8x1xf32>
    %256 = vector.broadcast %255 : vector<8x1xf32> to vector<8x8xf32>
    %257 = arith.subf %253, %256 : vector<8x8xf32>
    %258 = math.exp %257 : vector<8x8xf32>
    %cst_107 = arith.constant dense<0.000000e+00> : vector<8xf32>
    %259 = vector.multi_reduction <add>, %258, %cst_107 [1] : vector<8x8xf32> to vector<8xf32>
    %260 = vector.shape_cast %259 : vector<8xf32> to vector<8x1xf32>
    %261 = tpu.reciprocal %260 {approx = true} : vector<8x1xf32> -> vector<8x1xf32>
    %262 = vector.broadcast %261 : vector<8x1xf32> to vector<8x8xf32>
    %263 = arith.mulf %258, %262 : vector<8x8xf32>
    %264 = arith.truncf %263 : vector<8x8xf32> to vector<8x8xbf16>
    %cst_108 = arith.constant dense<0.000000e+00> : vector<8x16xf32>
    %265 = tpu.matmul %264, %250, %cst_108 {dimension_numbers = #tpu.dot_dimension_numbers<[1], [0], [0], [1], [0, 0, 1, 1], [], []>} : vector<8x8xbf16>, vector<8x16xbf16>, vector<8x16xf32> -> vector<8x16xf32>
    %266 = vector.extract_strided_slice %206 {offsets = [8, 16], sizes = [8, 16], strides = [1, 1]} : vector<16x128xbf16> to vector<8x16xbf16>
    %267 = vector.extract_strided_slice %206 {offsets = [8, 48], sizes = [8, 16], strides = [1, 1]} : vector<16x128xbf16> to vector<8x16xbf16>
    %268 = vector.extract_strided_slice %206 {offsets = [8, 80], sizes = [8, 16], strides = [1, 1]} : vector<16x128xbf16> to vector<8x16xbf16>
    %cst_109 = arith.constant dense<0.000000e+00> : vector<8x8xf32>
    %269 = tpu.matmul %266, %267, %cst_109 {dimension_numbers = #tpu.dot_dimension_numbers<[1], [1], [0], [0], [0, 0, 1, 0], [], []>} : vector<8x16xbf16>, vector<8x16xbf16>, vector<8x8xf32> -> vector<8x8xf32>
    %270 = vector.broadcast %247 : vector<1x8xf32> to vector<8x8xf32>
    %271 = arith.addf %269, %270 : vector<8x8xf32>
    %cst_110 = arith.constant dense<0xFF800000> : vector<8xf32>
    %272 = vector.multi_reduction <maximumf>, %271, %cst_110 [1] : vector<8x8xf32> to vector<8xf32>
    %273 = vector.shape_cast %272 : vector<8xf32> to vector<8x1xf32>
    %274 = vector.broadcast %273 : vector<8x1xf32> to vector<8x8xf32>
    %275 = arith.subf %271, %274 : vector<8x8xf32>
    %276 = math.exp %275 : vector<8x8xf32>
    %cst_111 = arith.constant dense<0.000000e+00> : vector<8xf32>
    %277 = vector.multi_reduction <add>, %276, %cst_111 [1] : vector<8x8xf32> to vector<8xf32>
    %278 = vector.shape_cast %277 : vector<8xf32> to vector<8x1xf32>
    %279 = tpu.reciprocal %278 {approx = true} : vector<8x1xf32> -> vector<8x1xf32>
    %280 = vector.broadcast %279 : vector<8x1xf32> to vector<8x8xf32>
    %281 = arith.mulf %276, %280 : vector<8x8xf32>
    %282 = arith.truncf %281 : vector<8x8xf32> to vector<8x8xbf16>
    %cst_112 = arith.constant dense<0.000000e+00> : vector<8x16xf32>
    %283 = tpu.matmul %282, %268, %cst_112 {dimension_numbers = #tpu.dot_dimension_numbers<[1], [0], [0], [1], [0, 0, 1, 1], [], []>} : vector<8x8xbf16>, vector<8x16xbf16>, vector<8x16xf32> -> vector<8x16xf32>
    %284 = tpu.concatenate %265, %283 in 1 : vector<8x16xf32>, vector<8x16xf32> -> vector<8x32xf32>
    %285 = tpu.concatenate %245, %284 in 0 : vector<8x32xf32>, vector<8x32xf32> -> vector<16x32xf32>
    %286 = arith.truncf %285 : vector<16x32xf32> to vector<16x32xbf16>
    %c1_113 = arith.constant 1 : index
    %c0_114 = arith.constant 0 : index
    %c0_115 = arith.constant 0 : index
    %287 = vector.load %arg7[%c1_113, %c0_114, %c0_115] : memref<2x32x32xbf16, #tpu.memory_space<vmem>>, vector<1x32x32xbf16>
    %288 = vector.shape_cast %287 : vector<1x32x32xbf16> to vector<32x32xbf16>
    %cst_116 = arith.constant dense<0.000000e+00> : vector<16x32xf32>
    %289 = tpu.matmul %286, %288, %cst_116 {dimension_numbers = #tpu.dot_dimension_numbers<[1], [0], [0], [1], [0, 0, 1, 1], [], []>} : vector<16x32xbf16>, vector<32x32xbf16>, vector<16x32xf32> -> vector<16x32xf32>
    %c1_117 = arith.constant 1 : index
    %c0_118 = arith.constant 0 : index
    %c0_119 = arith.constant 0 : index
    %290 = vector.load %arg8[%c1_117, %c0_118, %c0_119] : memref<2x1x32xf32, #tpu.memory_space<vmem>>, vector<1x1x32xf32>
    %291 = vector.shape_cast %290 : vector<1x1x32xf32> to vector<1x32xf32>
    %292 = vector.broadcast %291 : vector<1x32xf32> to vector<16x32xf32>
    %293 = arith.addf %289, %292 : vector<16x32xf32>
    %294 = arith.addf %293, %197 : vector<16x32xf32>
    %c1_120 = arith.constant 1 : index
    %c0_121 = arith.constant 0 : index
    %c0_122 = arith.constant 0 : index
    %295 = vector.load %arg9[%c1_120, %c0_121, %c0_122] : memref<2x1x32xf32, #tpu.memory_space<vmem>>, vector<1x1x32xf32>
    %296 = vector.shape_cast %295 : vector<1x1x32xf32> to vector<1x32xf32>
    %c1_123 = arith.constant 1 : index
    %c0_124 = arith.constant 0 : index
    %c0_125 = arith.constant 0 : index
    %297 = vector.load %arg10[%c1_123, %c0_124, %c0_125] : memref<2x1x32xf32, #tpu.memory_space<vmem>>, vector<1x1x32xf32>
    %298 = vector.shape_cast %297 : vector<1x1x32xf32> to vector<1x32xf32>
    %cst_126 = arith.constant dense<0.000000e+00> : vector<16xf32>
    %299 = vector.multi_reduction <add>, %294, %cst_126 [1] : vector<16x32xf32> to vector<16xf32>
    %300 = vector.shape_cast %299 : vector<16xf32> to vector<16x1xf32>
    %cst_127 = arith.constant 3.200000e+01 : f32
    %301 = vector.broadcast %cst_127 : f32 to vector<16x1xf32>
    %302 = arith.divf %300, %301 : vector<16x1xf32>
    %303 = vector.broadcast %302 : vector<16x1xf32> to vector<16x32xf32>
    %304 = arith.subf %294, %303 : vector<16x32xf32>
    %305 = arith.mulf %304, %304 : vector<16x32xf32>
    %cst_128 = arith.constant dense<0.000000e+00> : vector<16xf32>
    %306 = vector.multi_reduction <add>, %305, %cst_128 [1] : vector<16x32xf32> to vector<16xf32>
    %307 = vector.shape_cast %306 : vector<16xf32> to vector<16x1xf32>
    %cst_129 = arith.constant 3.200000e+01 : f32
    %308 = vector.broadcast %cst_129 : f32 to vector<16x1xf32>
    %309 = arith.divf %307, %308 : vector<16x1xf32>
    %cst_130 = arith.constant 9.99999996E-13 : f32
    %310 = vector.broadcast %cst_130 : f32 to vector<16x1xf32>
    %311 = arith.addf %309, %310 : vector<16x1xf32>
    %312 = math.rsqrt %311 : vector<16x1xf32>
    %313 = vector.broadcast %312 : vector<16x1xf32> to vector<16x32xf32>
    %314 = arith.mulf %304, %313 : vector<16x32xf32>
    %315 = vector.broadcast %296 : vector<1x32xf32> to vector<16x32xf32>
    %316 = arith.mulf %314, %315 : vector<16x32xf32>
    %317 = vector.broadcast %298 : vector<1x32xf32> to vector<16x32xf32>
    %318 = arith.addf %316, %317 : vector<16x32xf32>
    %319 = arith.truncf %318 : vector<16x32xf32> to vector<16x32xbf16>
    %c1_131 = arith.constant 1 : index
    %c0_132 = arith.constant 0 : index
    %c0_133 = arith.constant 0 : index
    %320 = vector.load %arg11[%c1_131, %c0_132, %c0_133] : memref<2x32x64xbf16, #tpu.memory_space<vmem>>, vector<1x32x64xbf16>
    %321 = vector.shape_cast %320 : vector<1x32x64xbf16> to vector<32x64xbf16>
    %cst_134 = arith.constant dense<0.000000e+00> : vector<16x64xf32>
    %322 = tpu.matmul %319, %321, %cst_134 {dimension_numbers = #tpu.dot_dimension_numbers<[1], [0], [0], [1], [0, 0, 1, 1], [], []>} : vector<16x32xbf16>, vector<32x64xbf16>, vector<16x64xf32> -> vector<16x64xf32>
    %c1_135 = arith.constant 1 : index
    %c0_136 = arith.constant 0 : index
    %c0_137 = arith.constant 0 : index
    %323 = vector.load %arg12[%c1_135, %c0_136, %c0_137] : memref<2x1x64xf32, #tpu.memory_space<vmem>>, vector<1x1x64xf32>
    %324 = vector.shape_cast %323 : vector<1x1x64xf32> to vector<1x64xf32>
    %325 = vector.broadcast %324 : vector<1x64xf32> to vector<16x64xf32>
    %326 = arith.addf %322, %325 : vector<16x64xf32>
    %cst_138 = arith.constant 5.000000e-01 : f32
    %327 = vector.broadcast %cst_138 : f32 to vector<16x64xf32>
    %328 = arith.mulf %327, %326 : vector<16x64xf32>
    %cst_139 = arith.constant 4.471500e-02 : f32
    %329 = vector.broadcast %cst_139 : f32 to vector<16x64xf32>
    %330 = arith.mulf %329, %326 : vector<16x64xf32>
    %331 = arith.mulf %330, %326 : vector<16x64xf32>
    %332 = arith.mulf %331, %326 : vector<16x64xf32>
    %333 = arith.addf %326, %332 : vector<16x64xf32>
    %cst_140 = arith.constant 0.797884583 : f32
    %334 = vector.broadcast %cst_140 : f32 to vector<16x64xf32>
    %335 = arith.mulf %334, %333 : vector<16x64xf32>
    %336 = math.tanh %335 : vector<16x64xf32>
    %cst_141 = arith.constant 1.000000e+00 : f32
    %337 = vector.broadcast %cst_141 : f32 to vector<16x64xf32>
    %338 = arith.addf %337, %336 : vector<16x64xf32>
    %339 = arith.mulf %328, %338 : vector<16x64xf32>
    %340 = arith.truncf %339 : vector<16x64xf32> to vector<16x64xbf16>
    %c1_142 = arith.constant 1 : index
    %c0_143 = arith.constant 0 : index
    %c0_144 = arith.constant 0 : index
    %341 = vector.load %arg13[%c1_142, %c0_143, %c0_144] : memref<2x64x32xbf16, #tpu.memory_space<vmem>>, vector<1x64x32xbf16>
    %342 = vector.shape_cast %341 : vector<1x64x32xbf16> to vector<64x32xbf16>
    %cst_145 = arith.constant dense<0.000000e+00> : vector<16x32xf32>
    %343 = tpu.matmul %340, %342, %cst_145 {dimension_numbers = #tpu.dot_dimension_numbers<[1], [0], [0], [1], [0, 0, 1, 1], [], []>} : vector<16x64xbf16>, vector<64x32xbf16>, vector<16x32xf32> -> vector<16x32xf32>
    %c1_146 = arith.constant 1 : index
    %c0_147 = arith.constant 0 : index
    %c0_148 = arith.constant 0 : index
    %344 = vector.load %arg14[%c1_146, %c0_147, %c0_148] : memref<2x1x32xf32, #tpu.memory_space<vmem>>, vector<1x1x32xf32>
    %345 = vector.shape_cast %344 : vector<1x1x32xf32> to vector<1x32xf32>
    %346 = vector.broadcast %345 : vector<1x32xf32> to vector<16x32xf32>
    %347 = arith.addf %343, %346 : vector<16x32xf32>
    %348 = arith.addf %347, %318 : vector<16x32xf32>
    %c1_149 = arith.constant 1 : index
    %c0_150 = arith.constant 0 : index
    %c0_151 = arith.constant 0 : index
    %349 = vector.load %arg15[%c1_149, %c0_150, %c0_151] : memref<2x1x32xf32, #tpu.memory_space<vmem>>, vector<1x1x32xf32>
    %350 = vector.shape_cast %349 : vector<1x1x32xf32> to vector<1x32xf32>
    %c1_152 = arith.constant 1 : index
    %c0_153 = arith.constant 0 : index
    %c0_154 = arith.constant 0 : index
    %351 = vector.load %arg16[%c1_152, %c0_153, %c0_154] : memref<2x1x32xf32, #tpu.memory_space<vmem>>, vector<1x1x32xf32>
    %352 = vector.shape_cast %351 : vector<1x1x32xf32> to vector<1x32xf32>
    %cst_155 = arith.constant dense<0.000000e+00> : vector<16xf32>
    %353 = vector.multi_reduction <add>, %348, %cst_155 [1] : vector<16x32xf32> to vector<16xf32>
    %354 = vector.shape_cast %353 : vector<16xf32> to vector<16x1xf32>
    %cst_156 = arith.constant 3.200000e+01 : f32
    %355 = vector.broadcast %cst_156 : f32 to vector<16x1xf32>
    %356 = arith.divf %354, %355 : vector<16x1xf32>
    %357 = vector.broadcast %356 : vector<16x1xf32> to vector<16x32xf32>
    %358 = arith.subf %348, %357 : vector<16x32xf32>
    %359 = arith.mulf %358, %358 : vector<16x32xf32>
    %cst_157 = arith.constant dense<0.000000e+00> : vector<16xf32>
    %360 = vector.multi_reduction <add>, %359, %cst_157 [1] : vector<16x32xf32> to vector<16xf32>
    %361 = vector.shape_cast %360 : vector<16xf32> to vector<16x1xf32>
    %cst_158 = arith.constant 3.200000e+01 : f32
    %362 = vector.broadcast %cst_158 : f32 to vector<16x1xf32>
    %363 = arith.divf %361, %362 : vector<16x1xf32>
    %cst_159 = arith.constant 9.99999996E-13 : f32
    %364 = vector.broadcast %cst_159 : f32 to vector<16x1xf32>
    %365 = arith.addf %363, %364 : vector<16x1xf32>
    %366 = math.rsqrt %365 : vector<16x1xf32>
    %367 = vector.broadcast %366 : vector<16x1xf32> to vector<16x32xf32>
    %368 = arith.mulf %358, %367 : vector<16x32xf32>
    %369 = vector.broadcast %350 : vector<1x32xf32> to vector<16x32xf32>
    %370 = arith.mulf %368, %369 : vector<16x32xf32>
    %371 = vector.broadcast %352 : vector<1x32xf32> to vector<16x32xf32>
    %372 = arith.addf %370, %371 : vector<16x32xf32>
    %373 = arith.truncf %372 : vector<16x32xf32> to vector<16x32xbf16>
    %c0_160 = arith.constant 0 : index
    %c0_161 = arith.constant 0 : index
    %374 = vector.load %arg17[%c0_160, %c0_161] : memref<32x128xbf16, #tpu.memory_space<vmem>>, vector<32x128xbf16>
    %cst_162 = arith.constant dense<0.000000e+00> : vector<16x128xf32>
    %375 = tpu.matmul %373, %374, %cst_162 {dimension_numbers = #tpu.dot_dimension_numbers<[1], [0], [0], [1], [0, 0, 1, 1], [], []>} : vector<16x32xbf16>, vector<32x128xbf16>, vector<16x128xf32> -> vector<16x128xf32>
    %c0_163 = arith.constant 0 : index
    %c0_164 = arith.constant 0 : index
    %376 = vector.load %arg18[%c0_163, %c0_164] : memref<1x128xf32, #tpu.memory_space<vmem>>, vector<1x128xf32>
    %377 = vector.broadcast %376 : vector<1x128xf32> to vector<16x128xf32>
    %378 = arith.addf %375, %377 : vector<16x128xf32>
    %c0_165 = arith.constant 0 : index
    %c0_166 = arith.constant 0 : index
    %379 = vector.load %arg19[%c0_165, %c0_166] : memref<16x128xf32, #tpu.memory_space<vmem>>, vector<16x128xf32>
    tpu.vector_store %arg19[%c0_165, %c0_166], %378 {strides = array<i32>} : memref<16x128xf32, #tpu.memory_space<vmem>>, vector<16x128xf32>,
    return
  }
  func.func @transform_0(%arg0: i32) -> (i32, i32) {
    %c0_i32 = arith.constant 0 : i32
    %c0_i32_0 = arith.constant 0 : i32
    return %arg0, %c0_i32 : i32, i32
  }
  func.func @transform_1(%arg0: i32) -> (i32, i32, i32) {
    %c0_i32 = arith.constant 0 : i32
    %c0_i32_0 = arith.constant 0 : i32
    %c0_i32_1 = arith.constant 0 : i32
    return %arg0, %c0_i32, %c0_i32_0 : i32, i32, i32
  }
  func.func @transform_2(%arg0: i32) -> (i32, i32) {
    %c0_i32 = arith.constant 0 : i32
    %c0_i32_0 = arith.constant 0 : i32
    %c0_i32_1 = arith.constant 0 : i32
    return %c0_i32, %c0_i32_0 : i32, i32
  }
  func.func @transform_3(%arg0: i32) -> (i32, i32) {
    %c0_i32 = arith.constant 0 : i32
    %c0_i32_0 = arith.constant 0 : i32
    %c0_i32_1 = arith.constant 0 : i32
    return %c0_i32, %c0_i32_0 : i32, i32
  }
  func.func @transform_4(%arg0: i32) -> (i32, i32, i32) {
    %c0_i32 = arith.constant 0 : i32
    %c0_i32_0 = arith.constant 0 : i32
    %c0_i32_1 = arith.constant 0 : i32
    %c0_i32_2 = arith.constant 0 : i32
    return %c0_i32, %c0_i32_0, %c0_i32_1 : i32, i32, i32
  }
  func.func @transform_5(%arg0: i32) -> (i32, i32, i32) {
    %c0_i32 = arith.constant 0 : i32
    %c0_i32_0 = arith.constant 0 : i32
    %c0_i32_1 = arith.constant 0 : i32
    %c0_i32_2 = arith.constant 0 : i32
    return %c0_i32, %c0_i32_0, %c0_i32_1 : i32, i32, i32
  }
  func.func @transform_6(%arg0: i32) -> (i32, i32, i32) {
    %c0_i32 = arith.constant 0 : i32
    %c0_i32_0 = arith.constant 0 : i32
    %c0_i32_1 = arith.constant 0 : i32
    %c0_i32_2 = arith.constant 0 : i32
    return %c0_i32, %c0_i32_0, %c0_i32_1 : i32, i32, i32
  }
  func.func @transform_7(%arg0: i32) -> (i32, i32, i32) {
    %c0_i32 = arith.constant 0 : i32
    %c0_i32_0 = arith.constant 0 : i32
    %c0_i32_1 = arith.constant 0 : i32
    %c0_i32_2 = arith.constant 0 : i32
    return %c0_i32, %c0_i32_0, %c0_i32_1 : i32, i32, i32
  }
  func.func @transform_8(%arg0: i32) -> (i32, i32, i32) {
    %c0_i32 = arith.constant 0 : i32
    %c0_i32_0 = arith.constant 0 : i32
    %c0_i32_1 = arith.constant 0 : i32
    %c0_i32_2 = arith.constant 0 : i32
    return %c0_i32, %c0_i32_0, %c0_i32_1 : i32, i32, i32
  }
  func.func @transform_9(%arg0: i32) -> (i32, i32, i32) {
    %c0_i32 = arith.constant 0 : i32
    %c0_i32_0 = arith.constant 0 : i32
    %c0_i32_1 = arith.constant 0 : i32
    %c0_i32_2 = arith.constant 0 : i32
    return %c0_i32, %c0_i32_0, %c0_i32_1 : i32, i32, i32
  }
  func.func @transform_10(%arg0: i32) -> (i32, i32, i32) {
    %c0_i32 = arith.constant 0 : i32
    %c0_i32_0 = arith.constant 0 : i32
    %c0_i32_1 = arith.constant 0 : i32
    %c0_i32_2 = arith.constant 0 : i32
    return %c0_i32, %c0_i32_0, %c0_i32_1 : i32, i32, i32
  }
  func.func @transform_11(%arg0: i32) -> (i32, i32, i32) {
    %c0_i32 = arith.constant 0 : i32
    %c0_i32_0 = arith.constant 0 : i32
    %c0_i32_1 = arith.constant 0 : i32
    %c0_i32_2 = arith.constant 0 : i32
    return %c0_i32, %c0_i32_0, %c0_i32_1 : i32, i32, i32
  }
  func.func @transform_12(%arg0: i32) -> (i32, i32, i32) {
    %c0_i32 = arith.constant 0 : i32
    %c0_i32_0 = arith.constant 0 : i32
    %c0_i32_1 = arith.constant 0 : i32
    %c0_i32_2 = arith.constant 0 : i32
    return %c0_i32, %c0_i32_0, %c0_i32_1 : i32, i32, i32
  }
  func.func @transform_13(%arg0: i32) -> (i32, i32, i32) {
    %c0_i32 = arith.constant 0 : i32
    %c0_i32_0 = arith.constant 0 : i32
    %c0_i32_1 = arith.constant 0 : i32
    %c0_i32_2 = arith.constant 0 : i32
    return %c0_i32, %c0_i32_0, %c0_i32_1 : i32, i32, i32
  }
  func.func @transform_14(%arg0: i32) -> (i32, i32, i32) {
    %c0_i32 = arith.constant 0 : i32
    %c0_i32_0 = arith.constant 0 : i32
    %c0_i32_1 = arith.constant 0 : i32
    %c0_i32_2 = arith.constant 0 : i32
    return %c0_i32, %c0_i32_0, %c0_i32_1 : i32, i32, i32
  }
  func.func @transform_15(%arg0: i32) -> (i32, i32, i32) {
    %c0_i32 = arith.constant 0 : i32
    %c0_i32_0 = arith.constant 0 : i32
    %c0_i32_1 = arith.constant 0 : i32
    %c0_i32_2 = arith.constant 0 : i32
    return %c0_i32, %c0_i32_0, %c0_i32_1 : i32, i32, i32
  }
  func.func @transform_16(%arg0: i32) -> (i32, i32) {
    %c0_i32 = arith.constant 0 : i32
    %c0_i32_0 = arith.constant 0 : i32
    %c0_i32_1 = arith.constant 0 : i32
    return %c0_i32, %c0_i32_0 : i32, i32
  }
  func.func @transform_17(%arg0: i32) -> (i32, i32) {
    %c0_i32 = arith.constant 0 : i32
    %c0_i32_0 = arith.constant 0 : i32
    %c0_i32_1 = arith.constant 0 : i32
    return %c0_i32, %c0_i32_0 : i32, i32
  }
  func.func @transform_18(%arg0: i32) -> (i32, i32) {
    %c0_i32 = arith.constant 0 : i32
    %c0_i32_0 = arith.constant 0 : i32
    return %arg0, %c0_i32 : i32, i32
  }
}

</mosaic_0001>

<llo_original>
// kernel: custom-call.4
$region0: #{custom-call.4}
  %s0 = inlined_call_operand.vmem [shape: s32[7,2,5], index: 0, kind: output, shape index: {}]

// kernel: custom-call.5
$region0: #{custom-call.5}
  %s0 = inlined_call_operand.vmem [shape: s32[7,2], index: 0, kind: output, shape index: {}]

// kernel: bert_for_ner_forward.1
$region0: #{bert_for_ner_forward.1}
  #allocation0 [shape = 'u32[]', space=smem, size = 0x4, offset = 0x4, fixed_abs, tag = 'smem constant byte address 0x4 - core index']
  #allocation1 [shape = 'u32[72,128]{1,0:T(1,128)}', space=vmem, size = 0x9000, scoped, tag = 'internal scratch']
  %s0 = inlined_call_operand.vmem [shape: f32[16,32], index: 0, kind: input, shape index: {}]
  %s1 = inlined_call_operand.vmem [shape: f32[2,1,8], index: 1, kind: input, shape index: {}]
  %s2 = inlined_call_operand.vmem [shape: f32[1,32], index: 2, kind: input, shape index: {}]
  %s3 = inlined_call_operand.vmem [shape: f32[1,32], index: 3, kind: input, shape index: {}]
  %s4 = inlined_call_operand.vmem [shape: bf16[2,32,128], index: 4, kind: input, shape index: {}]
  %s5 = inlined_call_operand.vmem [shape: f32[2,1,128], index: 5, kind: input, shape index: {}]
  %s6 = inlined_call_operand.vmem [shape: bf16[2,32,32], index: 6, kind: input, shape index: {}]
  %s7 = inlined_call_operand.vmem [shape: f32[2,1,32], index: 7, kind: input, shape index: {}]
  %s8 = inlined_call_operand.vmem [shape: f32[2,1,32], index: 8, kind: input, shape index: {}]
  %s9 = inlined_call_operand.vmem [shape: f32[2,1,32], index: 9, kind: input, shape index: {}]
  %s10 = inlined_call_operand.vmem [shape: bf16[2,32,64], index: 10, kind: input, shape index: {}]
  %s11 = inlined_call_operand.vmem [shape: f32[2,1,64], index: 11, kind: input, shape index: {}]
  %s12 = inlined_call_operand.vmem [shape: bf16[2,64,32], index: 12, kind: input, shape index: {}]
  %s13 = inlined_call_operand.vmem [shape: f32[2,1,32], index: 13, kind: input, shape index: {}]
  %s14 = inlined_call_operand.vmem [shape: f32[2,1,32], index: 14, kind: input, shape index: {}]
  %s15 = inlined_call_operand.vmem [shape: f32[2,1,32], index: 15, kind: input, shape index: {}]
  %s16 = inlined_call_operand.vmem [shape: bf16[32,128], index: 16, kind: input, shape index: {}]
  %s17 = inlined_call_operand.vmem [shape: f32[1,128], index: 17, kind: input, shape index: {}]
  %s18 = inlined_call_operand.vmem [shape: f32[16,128], index: 18, kind: output, shape index: {}]
  %s19 = sld [smem:[#allocation0]]
  $region82: #{bert_for_ner_forward.1} parent=0
    _
  %s21 = ssub.s32 1, %s19
  %s22 = scalar_select 0, %s21, %s19
  // Predicated region
  $region2: #{bert_for_ner_forward.1} parent=0 // pred_check
    _
  $region3: #{bert_for_ner_forward.1} parent=0 // pred_check_branch
    %24 = sbr.rel (0) target = $region5
  $region4: #{bert_for_ner_forward.1} parent=0 // pred_region
    _
  $region5: #{bert_for_ner_forward.1} parent=0 // pred_fallthru
    _
  // Predicated region
  $region6: #{bert_for_ner_forward.1} parent=0 // pred_check
    _
  $region7: #{bert_for_ner_forward.1} parent=0 // pred_check_branch
    %26 = sbr.rel (0) target = $region9
  $region8: #{bert_for_ner_forward.1} parent=0 // pred_region
    _
  $region9: #{bert_for_ner_forward.1} parent=0 // pred_fallthru
    _
  // Predicated region
  $region10: #{bert_for_ner_forward.1} parent=0 // pred_check
    _
  $region11: #{bert_for_ner_forward.1} parent=0 // pred_check_branch
    %28 = sbr.rel (0) target = $region13
  $region12: #{bert_for_ner_forward.1} parent=0 // pred_region
    _
  $region13: #{bert_for_ner_forward.1} parent=0 // pred_fallthru
    _
  // Predicated region
  $region14: #{bert_for_ner_forward.1} parent=0 // pred_check
    _
  $region15: #{bert_for_ner_forward.1} parent=0 // pred_check_branch
    %30 = sbr.rel (0) target = $region17
  $region16: #{bert_for_ner_forward.1} parent=0 // pred_region
    _
  $region17: #{bert_for_ner_forward.1} parent=0 // pred_fallthru
    _
  // Predicated region
  $region18: #{bert_for_ner_forward.1} parent=0 // pred_check
    _
  $region19: #{bert_for_ner_forward.1} parent=0 // pred_check_branch
    %32 = sbr.rel (0) target = $region21
  $region20: #{bert_for_ner_forward.1} parent=0 // pred_region
    _
  $region21: #{bert_for_ner_forward.1} parent=0 // pred_fallthru
    _
  // Predicated region
  $region22: #{bert_for_ner_forward.1} parent=0 // pred_check
    _
  $region23: #{bert_for_ner_forward.1} parent=0 // pred_check_branch
    %34 = sbr.rel (0) target = $region25
  $region24: #{bert_for_ner_forward.1} parent=0 // pred_region
    _
  $region25: #{bert_for_ner_forward.1} parent=0 // pred_fallthru
    _
  // Predicated region
  $region26: #{bert_for_ner_forward.1} parent=0 // pred_check
    _
  $region27: #{bert_for_ner_forward.1} parent=0 // pred_check_branch
    %36 = sbr.rel (0) target = $region29
  $region28: #{bert_for_ner_forward.1} parent=0 // pred_region
    _
  $region29: #{bert_for_ner_forward.1} parent=0 // pred_fallthru
    _
  // Predicated region
  $region30: #{bert_for_ner_forward.1} parent=0 // pred_check
    _
  $region31: #{bert_for_ner_forward.1} parent=0 // pred_check_branch
    %38 = sbr.rel (0) target = $region33
  $region32: #{bert_for_ner_forward.1} parent=0 // pred_region
    _
  $region33: #{bert_for_ner_forward.1} parent=0 // pred_fallthru
    _
  // Predicated region
  $region34: #{bert_for_ner_forward.1} parent=0 // pred_check
    _
  $region35: #{bert_for_ner_forward.1} parent=0 // pred_check_branch
    %40 = sbr.rel (0) target = $region37
  $region36: #{bert_for_ner_forward.1} parent=0 // pred_region
    _
  $region37: #{bert_for_ner_forward.1} parent=0 // pred_fallthru
    _
  // Predicated region
  $region38: #{bert_for_ner_forward.1} parent=0 // pred_check
    _
  $region39: #{bert_for_ner_forward.1} parent=0 // pred_check_branch
    %42 = sbr.rel (0) target = $region41
  $region40: #{bert_for_ner_forward.1} parent=0 // pred_region
    _
  $region41: #{bert_for_ner_forward.1} parent=0 // pred_fallthru
    _
  // Predicated region
  $region42: #{bert_for_ner_forward.1} parent=0 // pred_check
    _
  $region43: #{bert_for_ner_forward.1} parent=0 // pred_check_branch
    %44 = sbr.rel (0) target = $region45
  $region44: #{bert_for_ner_forward.1} parent=0 // pred_region
    _
  $region45: #{bert_for_ner_forward.1} parent=0 // pred_fallthru
    _
  // Predicated region
  $region46: #{bert_for_ner_forward.1} parent=0 // pred_check
    _
  $region47: #{bert_for_ner_forward.1} parent=0 // pred_check_branch
    %46 = sbr.rel (0) target = $region49
  $region48: #{bert_for_ner_forward.1} parent=0 // pred_region
    _
  $region49: #{bert_for_ner_forward.1} parent=0 // pred_fallthru
    _
  // Predicated region
  $region50: #{bert_for_ner_forward.1} parent=0 // pred_check
    _
  $region51: #{bert_for_ner_forward.1} parent=0 // pred_check_branch
    %48 = sbr.rel (0) target = $region53
  $region52: #{bert_for_ner_forward.1} parent=0 // pred_region
    _
  $region53: #{bert_for_ner_forward.1} parent=0 // pred_fallthru
    _
  // Predicated region
  $region54: #{bert_for_ner_forward.1} parent=0 // pred_check
    _
  $region55: #{bert_for_ner_forward.1} parent=0 // pred_check_branch
    %50 = sbr.rel (0) target = $region57
  $region56: #{bert_for_ner_forward.1} parent=0 // pred_region
    _
  $region57: #{bert_for_ner_forward.1} parent=0 // pred_fallthru
    _
  // Predicated region
  $region58: #{bert_for_ner_forward.1} parent=0 // pred_check
    _
  $region59: #{bert_for_ner_forward.1} parent=0 // pred_check_branch
    %52 = sbr.rel (0) target = $region61
  $region60: #{bert_for_ner_forward.1} parent=0 // pred_region
    _
  $region61: #{bert_for_ner_forward.1} parent=0 // pred_fallthru
    _
  // Predicated region
  $region62: #{bert_for_ner_forward.1} parent=0 // pred_check
    _
  $region63: #{bert_for_ner_forward.1} parent=0 // pred_check_branch
    %54 = sbr.rel (0) target = $region65
  $region64: #{bert_for_ner_forward.1} parent=0 // pred_region
    _
  $region65: #{bert_for_ner_forward.1} parent=0 // pred_fallthru
    _
  // Predicated region
  $region66: #{bert_for_ner_forward.1} parent=0 // pred_check
    _
  $region67: #{bert_for_ner_forward.1} parent=0 // pred_check_branch
    %56 = sbr.rel (0) target = $region69
  $region68: #{bert_for_ner_forward.1} parent=0 // pred_region
    _
  $region69: #{bert_for_ner_forward.1} parent=0 // pred_fallthru
    _
  // Predicated region
  $region70: #{bert_for_ner_forward.1} parent=0 // pred_check
    _
  $region71: #{bert_for_ner_forward.1} parent=0 // pred_check_branch
    %58 = sbr.rel (0) target = $region73
  $region72: #{bert_for_ner_forward.1} parent=0 // pred_region
    _
  $region73: #{bert_for_ner_forward.1} parent=0 // pred_fallthru
    _
  %v60 = vld [vmem:[%s0] sm:$0xff]
  %v61 = vld [vmem:[%s0 + $0x8] sm:$0xff]
  %v62 = vld [vmem:[%s2] sm:$0x1]
  %v63 = vld [vmem:[%s3] sm:$0x1]
  %vm64 = vcmask 261120
  %v65 = vsel %vm64, %v60, 0.0
  %66 = vadd.xlane.f32.xlu0 %v65
  %v67 = vpop.xlane.xlu0 %66
  %v68 = vsel %vm64, %v61, 0.0
  %69 = vadd.xlane.f32.xlu0 %v68
  %v70 = vpop.xlane.xlu0 %69
  %v71 = vrcp.pop 32.0
  %v72 = vmul.f32 32.0, %v71
  %v73 = vsub.f32 1.0, %v72
  %v74 = vmul.f32 %v71, %v73
  %v75 = vadd.f32 %v71, %v74
  %vm76 = vweird.f32 %v71
  %v77 = vsel %vm76, %v71, %v75
  %v78 = vmul.f32 %v67, %v77
  %v79 = vmul.f32 %v70, %v77
  %v80 = vsub.f32 %v60, %v78
  %v81 = vsub.f32 %v61, %v79
  %v82 = vmul.f32 %v80, %v80
  %v83 = vmul.f32 %v81, %v81
  %v84 = vsel %vm64, %v82, 0.0
  %85 = vadd.xlane.f32.xlu0 %v84
  %v86 = vpop.xlane.xlu0 %85
  %v87 = vsel %vm64, %v83, 0.0
  %88 = vadd.xlane.f32.xlu0 %v87
  %v89 = vpop.xlane.xlu0 %88
  %v90 = vmul.f32 %v86, %v77
  %v91 = vmul.f32 %v89, %v77
  %v92 = vadd.f32 %v90, 1e-12
  %v93 = vadd.f32 %v91, 1e-12
  %v94 = vrsqrt.pop %v92
  %v95 = vmul.f32 %v94, %v92
  %v96 = vmul.f32 %v95, %v94
  %v97 = vmul.f32 0.5, %v96
  %v98 = vsub.f32 1.5, %v97
  %v99 = vmul.f32 %v94, %v98
  %vm100 = vweird.f32 %v92
  %vm101 = vweird.f32 %v94
  %vm102 = vmor %vm100, %vm101
  %v103 = vsel %vm102, %v94, %v99
  %v104 = vrsqrt.pop %v93
  %v105 = vmul.f32 %v104, %v93
  %v106 = vmul.f32 %v105, %v104
  %v107 = vmul.f32 0.5, %v106
  %v108 = vsub.f32 1.5, %v107
  %v109 = vmul.f32 %v104, %v108
  %vm110 = vweird.f32 %v93
  %vm111 = vweird.f32 %v104
  %vm112 = vmor %vm110, %vm111
  %v113 = vsel %vm112, %v104, %v109
  %v114 = vmul.f32 %v80, %v103
  %v115 = vmul.f32 %v81, %v113
  %v117 = vperm.slane %v62, 0
  %v119 = vmul.f32 %v114, %v117
  %v120 = vmul.f32 %v115, %v117
  %v122 = vperm.slane %v63, 0
  %v124 = vadd.f32 %v119, %v122
  %v125 = vadd.f32 %v120, %v122
  %v126 = vpack.c.bf16 %v125, %v124
  %v127 = vld [vmem:[%s4] sm:$0xf]
  %v128 = vld [vmem:[%s4 + $0x4] sm:$0xf]
  %v129 = vld [vmem:[%s4 + $0x8] sm:$0xf]
  %v130 = vld [vmem:[%s4 + $0xc] sm:$0xf]
  %v131 = vld [vmem:[%s5] sm:$0x1]
  %v133 = vperm.slane %v131, 0
  %v139 = vunpack.c.l.b16 %v127
  %v140 = vunpack.c.l.b16 %v128
  %v141 = vunpack.c.l.b16 %v129
  %v142 = vunpack.c.l.b16 %v130
  %v143 = vpack.c.b16 %v140, %v139
  %v144 = vpack.c.b16 %v142, %v141
  %v148 = vsel %vm64, %v126, 0
  %150 = vmatpush.bf16.msra.mxu0 0
  %151 = vmatpush.bf16.msra.mxu0 0
  %152 = vmatpush.bf16.msra.mxu0 0
  %153 = vmatpush.bf16.msra.mxu0 0
  %154 = vmatpush.bf16.msra.mxu0 0
  %155 = vmatpush.bf16.msra.mxu0 0
  %156 = vmatpush.bf16.msra.mxu0 %v144
  %157 = vmatpush.bf16.msra.mxu0 %v143
  %158 = vmatmul.bf16.gmra.mxu0 %v148
  %v159 = vpop.f32.mrf.mxu0
  %v160 = vadd.f32 %v133, %v159
  %v161 = vpop.f32.mrf.mxu0
  %v162 = vadd.f32 %v133, %v161
  %163 = vdwg.mxu0
  %v164 = vpack.c.bf16 %v160, %v160
  %v165 = vpack.c.bf16 %v162, %v162
  %v166 = vld [vmem:[%s1] sm:$0x1]
  %v168 = vperm.slane %v166, 0
  %v171 = vunpack.c.l.b16 %v164
  %v172 = vpack.c.b16 %v171, %v171
  %173 = vrot.lane.b32.xlu0 %v172, 96
  %v174 = vpop.permute.xlu0 %173
  %vm175 = vcmask 130048
  %v177 = vsel %vm175, %v164, 0
  %v180 = vsel %vm175, %v174, 0
  %182 = vmatpush.bf16.xpose.msra.mxu0 0
  %183 = vmatpush.bf16.xpose.msra.mxu0 0
  %184 = vmatpush.bf16.xpose.msra.mxu0 0
  %185 = vmatpush.bf16.xpose.msra.mxu0 0
  %186 = vmatpush.bf16.xpose.msra.mxu0 0
  %187 = vmatpush.bf16.xpose.msra.mxu0 0
  %188 = vmatpush.bf16.xpose.msra.mxu0 0
  %189 = vmatpush.bf16.xpose.msra.mxu0 %v180
  %190 = vmatmul.bf16.gmra.mxu0 %v177
  %v191 = vpop.f32.mrf.mxu0
  %v192 = vadd.f32 %v168, %v191
  %v193 = vpop.f32.mrf.mxu0
  %194 = vdwg.mxu0
  %vm195 = vcmask 64512
  %v196 = vsel %vm195, %v192, -inf
  %197 = vmax.xlane.f32.xlu0 %v196
  %v198 = vpop.xlane.xlu0 %197
  %v199 = vsub.f32 %v192, %v198
  %v200 = vmul.f32 %v199, 1.442695
  %v201 = vpow.pop %v200
  %v202 = vsel %vm195, %v201, 0.0
  %203 = vadd.xlane.f32.xlu0 %v202
  %v204 = vpop.xlane.xlu0 %203
  %v205 = vrcp.pop %v204
  %v206 = vmul.f32 %v201, %v205
  %v207 = vpack.c.bf16 %v206, %v206
  %208 = vrot.lane.b32.xlu0 %v172, 64
  %v209 = vpop.permute.xlu0 %208
  %v211 = vsel %vm195, %v207, 0
  %vm213 = vcmask 1043456
  %v215 = vsel %vm213, %v209, 0
  %217 = vmatpush.bf16.msra.mxu0 0
  %218 = vmatpush.bf16.msra.mxu0 0
  %219 = vmatpush.bf16.msra.mxu0 0
  %220 = vmatpush.bf16.msra.mxu0 0
  %221 = vmatpush.bf16.msra.mxu0 0
  %222 = vmatpush.bf16.msra.mxu0 0
  %223 = vmatpush.bf16.msra.mxu0 0
  %224 = vmatpush.bf16.msra.mxu0 %v215
  %225 = vmatmul.bf16.gmra.mxu0 %v211
  %v226 = vpop.f32.mrf.mxu0
  %v227 = vadd.f32 0.0, %v226
  %v228 = vpop.f32.mrf.mxu0
  %229 = vdwg.mxu0
  %230 = vrot.lane.b32.xlu0 %v172, 112
  %v231 = vpop.permute.xlu0 %230
  %232 = vrot.lane.b32.xlu0 %v172, 80
  %v233 = vpop.permute.xlu0 %232
  %v235 = vsel %vm175, %v231, 0
  %v238 = vsel %vm175, %v233, 0
  %240 = vmatpush.bf16.xpose.msra.mxu0 0
  %241 = vmatpush.bf16.xpose.msra.mxu0 0
  %242 = vmatpush.bf16.xpose.msra.mxu0 0
  %243 = vmatpush.bf16.xpose.msra.mxu0 0
  %244 = vmatpush.bf16.xpose.msra.mxu0 0
  %245 = vmatpush.bf16.xpose.msra.mxu0 0
  %246 = vmatpush.bf16.xpose.msra.mxu0 0
  %247 = vmatpush.bf16.xpose.msra.mxu0 %v238
  %248 = vmatmul.bf16.gmra.mxu0 %v235
  %v249 = vpop.f32.mrf.mxu0
  %v250 = vadd.f32 %v168, %v249
  %v251 = vpop.f32.mrf.mxu0
  %252 = vdwg.mxu0
  %v253 = vsel %vm195, %v250, -inf
  %254 = vmax.xlane.f32.xlu0 %v253
  %v255 = vpop.xlane.xlu0 %254
  %v256 = vsub.f32 %v250, %v255
  %v257 = vmul.f32 %v256, 1.442695
  %v258 = vpow.pop %v257
  %v259 = vsel %vm195, %v258, 0.0
  %260 = vadd.xlane.f32.xlu0 %v259
  %v261 = vpop.xlane.xlu0 %260
  %v262 = vrcp.pop %v261
  %v263 = vmul.f32 %v258, %v262
  %v264 = vpack.c.bf16 %v263, %v263
  %265 = vrot.lane.b32.xlu0 %v172, 48
  %v266 = vpop.permute.xlu0 %265
  %v268 = vsel %vm195, %v264, 0
  %v271 = vsel %vm213, %v266, 0
  %273 = vmatpush.bf16.msra.mxu0 0
  %274 = vmatpush.bf16.msra.mxu0 0
  %275 = vmatpush.bf16.msra.mxu0 0
  %276 = vmatpush.bf16.msra.mxu0 0
  %277 = vmatpush.bf16.msra.mxu0 0
  %278 = vmatpush.bf16.msra.mxu0 0
  %279 = vmatpush.bf16.msra.mxu0 0
  %280 = vmatpush.bf16.msra.mxu0 %v271
  %281 = vmatmul.bf16.gmra.mxu0 %v268
  %v282 = vpop.f32.mrf.mxu0
  %v283 = vadd.f32 0.0, %v282
  %v284 = vpop.f32.mrf.mxu0
  %285 = vdwg.mxu0
  %287 = vrot.lane.b32.xlu0 %v283, 16
  %v288 = vpop.permute.xlu0 %287
  %v290 = vsel %vm175, %v227, %v288
  %s291 = scalar_lea.vmem %s1, 1
  %v292 = vld [vmem:[%s291] sm:$0x1]
  %v294 = vperm.slane %v292, 0
  %v297 = vunpack.c.l.b16 %v165
  %v298 = vpack.c.b16 %v297, %v297
  %299 = vrot.lane.b32.xlu0 %v298, 96
  %v300 = vpop.permute.xlu0 %299
  %v302 = vsel %vm175, %v165, 0
  %v305 = vsel %vm175, %v300, 0
  %307 = vmatpush.bf16.xpose.msra.mxu0 0
  %308 = vmatpush.bf16.xpose.msra.mxu0 0
  %309 = vmatpush.bf16.xpose.msra.mxu0 0
  %310 = vmatpush.bf16.xpose.msra.mxu0 0
  %311 = vmatpush.bf16.xpose.msra.mxu0 0
  %312 = vmatpush.bf16.xpose.msra.mxu0 0
  %313 = vmatpush.bf16.xpose.msra.mxu0 0
  %314 = vmatpush.bf16.xpose.msra.mxu0 %v305
  %315 = vmatmul.bf16.gmra.mxu0 %v302
  %v316 = vpop.f32.mrf.mxu0
  %v317 = vadd.f32 %v294, %v316
  %v318 = vpop.f32.mrf.mxu0
  %319 = vdwg.mxu0
  %v320 = vsel %vm195, %v317, -inf
  %321 = vmax.xlane.f32.xlu0 %v320
  %v322 = vpop.xlane.xlu0 %321
  %v323 = vsub.f32 %v317, %v322
  %v324 = vmul.f32 %v323, 1.442695
  %v325 = vpow.pop %v324
  %v326 = vsel %vm195, %v325, 0.0
  %327 = vadd.xlane.f32.xlu0 %v326
  %v328 = vpop.xlane.xlu0 %327
  %v329 = vrcp.pop %v328
  %v330 = vmul.f32 %v325, %v329
  %v331 = vpack.c.bf16 %v330, %v330
  %332 = vrot.lane.b32.xlu0 %v298, 64
  %v333 = vpop.permute.xlu0 %332
  %v335 = vsel %vm195, %v331, 0
  %v338 = vsel %vm213, %v333, 0
  %340 = vmatpush.bf16.msra.mxu0 0
  %341 = vmatpush.bf16.msra.mxu0 0
  %342 = vmatpush.bf16.msra.mxu0 0
  %343 = vmatpush.bf16.msra.mxu0 0
  %344 = vmatpush.bf16.msra.mxu0 0
  %345 = vmatpush.bf16.msra.mxu0 0
  %346 = vmatpush.bf16.msra.mxu0 0
  %347 = vmatpush.bf16.msra.mxu0 %v338
  %348 = vmatmul.bf16.gmra.mxu0 %v335
  %v349 = vpop.f32.mrf.mxu0
  %v350 = vadd.f32 0.0, %v349
  %v351 = vpop.f32.mrf.mxu0
  %352 = vdwg.mxu0
  %353 = vrot.lane.b32.xlu0 %v298, 112
  %v354 = vpop.permute.xlu0 %353
  %355 = vrot.lane.b32.xlu0 %v298, 80
  %v356 = vpop.permute.xlu0 %355
  %v358 = vsel %vm175, %v354, 0
  %v361 = vsel %vm175, %v356, 0
  %363 = vmatpush.bf16.xpose.msra.mxu0 0
  %364 = vmatpush.bf16.xpose.msra.mxu0 0
  %365 = vmatpush.bf16.xpose.msra.mxu0 0
  %366 = vmatpush.bf16.xpose.msra.mxu0 0
  %367 = vmatpush.bf16.xpose.msra.mxu0 0
  %368 = vmatpush.bf16.xpose.msra.mxu0 0
  %369 = vmatpush.bf16.xpose.msra.mxu0 0
  %370 = vmatpush.bf16.xpose.msra.mxu0 %v361
  %371 = vmatmul.bf16.gmra.mxu0 %v358
  %v372 = vpop.f32.mrf.mxu0
  %v373 = vadd.f32 %v294, %v372
  %v374 = vpop.f32.mrf.mxu0
  %375 = vdwg.mxu0
  %v376 = vsel %vm195, %v373, -inf
  %377 = vmax.xlane.f32.xlu0 %v376
  %v378 = vpop.xlane.xlu0 %377
  %v379 = vsub.f32 %v373, %v378
  %v380 = vmul.f32 %v379, 1.442695
  %v381 = vpow.pop %v380
  %v382 = vsel %vm195, %v381, 0.0
  %383 = vadd.xlane.f32.xlu0 %v382
  %v384 = vpop.xlane.xlu0 %383
  %v385 = vrcp.pop %v384
  %v386 = vmul.f32 %v381, %v385
  %v387 = vpack.c.bf16 %v386, %v386
  %388 = vrot.lane.b32.xlu0 %v298, 48
  %v389 = vpop.permute.xlu0 %388
  %v391 = vsel %vm195, %v387, 0
  %v394 = vsel %vm213, %v389, 0
  %396 = vmatpush.bf16.msra.mxu0 0
  %397 = vmatpush.bf16.msra.mxu0 0
  %398 = vmatpush.bf16.msra.mxu0 0
  %399 = vmatpush.bf16.msra.mxu0 0
  %400 = vmatpush.bf16.msra.mxu0 0
  %401 = vmatpush.bf16.msra.mxu0 0
  %402 = vmatpush.bf16.msra.mxu0 0
  %403 = vmatpush.bf16.msra.mxu0 %v394
  %404 = vmatmul.bf16.gmra.mxu0 %v391
  %v405 = vpop.f32.mrf.mxu0
  %v406 = vadd.f32 0.0, %v405
  %v407 = vpop.f32.mrf.mxu0
  %408 = vdwg.mxu0
  %410 = vrot.lane.b32.xlu0 %v406, 16
  %v411 = vpop.permute.xlu0 %410
  %v413 = vsel %vm175, %v350, %v411
  %v414 = vpack.c.bf16 %v413, %v290
  %v415 = vld [vmem:[%s6] sm:$0xf]
  %v416 = vld [vmem:[%s6 + $0x4] sm:$0xf]
  %v417 = vld [vmem:[%s6 + $0x8] sm:$0xf]
  %v418 = vld [vmem:[%s6 + $0xc] sm:$0xf]
  %v419 = vld [vmem:[%s7] sm:$0x1]
  %v421 = vperm.slane %v419, 0
  %v427 = vunpack.c.l.b16 %v415
  %v428 = vunpack.c.l.b16 %v416
  %v429 = vunpack.c.l.b16 %v417
  %v430 = vunpack.c.l.b16 %v418
  %v431 = vpack.c.b16 %v428, %v427
  %v432 = vpack.c.b16 %v430, %v429
  %v436 = vsel %vm64, %v414, 0
  %438 = vmatpush.bf16.msra.mxu0 0
  %439 = vmatpush.bf16.msra.mxu0 0
  %440 = vmatpush.bf16.msra.mxu0 0
  %441 = vmatpush.bf16.msra.mxu0 0
  %442 = vmatpush.bf16.msra.mxu0 0
  %443 = vmatpush.bf16.msra.mxu0 0
  %444 = vmatpush.bf16.msra.mxu0 %v432
  %445 = vmatpush.bf16.msra.mxu0 %v431
  %446 = vmatmul.bf16.gmra.mxu0 %v436
  %v447 = vpop.f32.mrf.mxu0
  %v448 = vadd.f32 %v421, %v447
  %v449 = vpop.f32.mrf.mxu0
  %v450 = vadd.f32 %v421, %v449
  %451 = vdwg.mxu0
  %v452 = vadd.f32 %v448, %v124
  %v453 = vadd.f32 %v450, %v125
  %v454 = vld [vmem:[%s8] sm:$0x1]
  %v455 = vld [vmem:[%s9] sm:$0x1]
  %v456 = vsel %vm64, %v452, 0.0
  %457 = vadd.xlane.f32.xlu0 %v456
  %v458 = vpop.xlane.xlu0 %457
  %v459 = vsel %vm64, %v453, 0.0
  %460 = vadd.xlane.f32.xlu0 %v459
  %v461 = vpop.xlane.xlu0 %460
  %v462 = vmul.f32 %v458, %v77
  %v463 = vmul.f32 %v461, %v77
  %v464 = vsub.f32 %v452, %v462
  %v465 = vsub.f32 %v453, %v463
  %v466 = vmul.f32 %v464, %v464
  %v467 = vmul.f32 %v465, %v465
  %v468 = vsel %vm64, %v466, 0.0
  %469 = vadd.xlane.f32.xlu0 %v468
  %v470 = vpop.xlane.xlu0 %469
  %v471 = vsel %vm64, %v467, 0.0
  %472 = vadd.xlane.f32.xlu0 %v471
  %v473 = vpop.xlane.xlu0 %472
  %v474 = vmul.f32 %v470, %v77
  %v475 = vmul.f32 %v473, %v77
  %v476 = vadd.f32 %v474, 1e-12
  %v477 = vadd.f32 %v475, 1e-12
  %v478 = vrsqrt.pop %v476
  %v479 = vmul.f32 %v478, %v476
  %v480 = vmul.f32 %v479, %v478
  %v481 = vmul.f32 0.5, %v480
  %v482 = vsub.f32 1.5, %v481
  %v483 = vmul.f32 %v478, %v482
  %vm484 = vweird.f32 %v476
  %vm485 = vweird.f32 %v478
  %vm486 = vmor %vm484, %vm485
  %v487 = vsel %vm486, %v478, %v483
  %v488 = vrsqrt.pop %v477
  %v489 = vmul.f32 %v488, %v477
  %v490 = vmul.f32 %v489, %v488
  %v491 = vmul.f32 0.5, %v490
  %v492 = vsub.f32 1.5, %v491
  %v493 = vmul.f32 %v488, %v492
  %vm494 = vweird.f32 %v477
  %vm495 = vweird.f32 %v488
  %vm496 = vmor %vm494, %vm495
  %v497 = vsel %vm496, %v488, %v493
  %v498 = vmul.f32 %v464, %v487
  %v499 = vmul.f32 %v465, %v497
  %v501 = vperm.slane %v454, 0
  %v503 = vmul.f32 %v498, %v501
  %v504 = vmul.f32 %v499, %v501
  %v506 = vperm.slane %v455, 0
  %v508 = vadd.f32 %v503, %v506
  %v509 = vadd.f32 %v504, %v506
  %v510 = vpack.c.bf16 %v509, %v508
  %v511 = vld [vmem:[%s10] sm:$0xf]
  %v512 = vld [vmem:[%s10 + $0x4] sm:$0xf]
  %v513 = vld [vmem:[%s10 + $0x8] sm:$0xf]
  %v514 = vld [vmem:[%s10 + $0xc] sm:$0xf]
  %v515 = vld [vmem:[%s11] sm:$0x1]
  %v517 = vperm.slane %v515, 0
  %v523 = vunpack.c.l.b16 %v511
  %v524 = vunpack.c.l.b16 %v512
  %v525 = vunpack.c.l.b16 %v513
  %v526 = vunpack.c.l.b16 %v514
  %v527 = vpack.c.b16 %v524, %v523
  %v528 = vpack.c.b16 %v526, %v525
  %v532 = vsel %vm64, %v510, 0
  %534 = vmatpush.bf16.msra.mxu0 0
  %535 = vmatpush.bf16.msra.mxu0 0
  %536 = vmatpush.bf16.msra.mxu0 0
  %537 = vmatpush.bf16.msra.mxu0 0
  %538 = vmatpush.bf16.msra.mxu0 0
  %539 = vmatpush.bf16.msra.mxu0 0
  %540 = vmatpush.bf16.msra.mxu0 %v528
  %541 = vmatpush.bf16.msra.mxu0 %v527
  %542 = vmatmul.bf16.gmra.mxu0 %v532
  %v543 = vpop.f32.mrf.mxu0
  %v544 = vadd.f32 %v517, %v543
  %v545 = vpop.f32.mrf.mxu0
  %v546 = vadd.f32 %v517, %v545
  %547 = vdwg.mxu0
  %v548 = vmul.f32 %v544, 0.5
  %v549 = vmul.f32 %v546, 0.5
  %v550 = vmul.f32 %v544, 0.044715
  %v551 = vmul.f32 %v546, 0.044715
  %v552 = vmul.f32 %v550, %v544
  %v553 = vmul.f32 %v551, %v546
  %v554 = vmul.f32 %v552, %v544
  %v555 = vmul.f32 %v553, %v546
  %v556 = vadd.f32 %v544, %v554
  %v557 = vadd.f32 %v546, %v555
  %v558 = vmul.f32 %v556, 0.7978846
  %v559 = vmul.f32 %v557, 0.7978846
  %v560 = vtanh.pop %v558
  %v561 = vtanh.pop %v559
  %v562 = vadd.f32 %v560, 1.0
  %v563 = vadd.f32 %v561, 1.0
  %v564 = vmul.f32 %v548, %v562
  %v565 = vmul.f32 %v549, %v563
  %v566 = vpack.c.bf16 %v565, %v564
  %v567 = vld [vmem:[%s12] sm:$0xf]
  %v568 = vld [vmem:[%s12 + $0x4] sm:$0xf]
  %v569 = vld [vmem:[%s12 + $0x8] sm:$0xf]
  %v570 = vld [vmem:[%s12 + $0xc] sm:$0xf]
  %v571 = vld [vmem:[%s12 + $0x10] sm:$0xf]
  %v572 = vld [vmem:[%s12 + $0x14] sm:$0xf]
  %v573 = vld [vmem:[%s12 + $0x18] sm:$0xf]
  %v574 = vld [vmem:[%s12 + $0x1c] sm:$0xf]
  %v575 = vld [vmem:[%s13] sm:$0x1]
  %v577 = vperm.slane %v575, 0
  %v587 = vunpack.c.l.b16 %v567
  %v588 = vunpack.c.l.b16 %v568
  %v589 = vunpack.c.l.b16 %v569
  %v590 = vunpack.c.l.b16 %v570
  %v591 = vunpack.c.l.b16 %v571
  %v592 = vunpack.c.l.b16 %v572
  %v593 = vunpack.c.l.b16 %v573
  %v594 = vunpack.c.l.b16 %v574
  %v595 = vpack.c.b16 %v588, %v587
  %v596 = vpack.c.b16 %v590, %v589
  %v597 = vpack.c.b16 %v592, %v591
  %v598 = vpack.c.b16 %v594, %v593
  %vm603 = vcmask 523264
  %v605 = vsel %vm603, %v566, 0
  %607 = vmatpush.bf16.msra.mxu0 0
  %608 = vmatpush.bf16.msra.mxu0 0
  %609 = vmatpush.bf16.msra.mxu0 0
  %610 = vmatpush.bf16.msra.mxu0 0
  %611 = vmatpush.bf16.msra.mxu0 %v598
  %612 = vmatpush.bf16.msra.mxu0 %v597
  %613 = vmatpush.bf16.msra.mxu0 %v596
  %614 = vmatpush.bf16.msra.mxu0 %v595
  %615 = vmatmul.bf16.gmra.mxu0 %v605
  %v616 = vpop.f32.mrf.mxu0
  %v617 = vadd.f32 %v577, %v616
  %v618 = vpop.f32.mrf.mxu0
  %v619 = vadd.f32 %v577, %v618
  %620 = vdwg.mxu0
  %v621 = vadd.f32 %v617, %v508
  %v622 = vadd.f32 %v619, %v509
  %v623 = vld [vmem:[%s14] sm:$0x1]
  %v624 = vld [vmem:[%s15] sm:$0x1]
  %v625 = vsel %vm64, %v621, 0.0
  %626 = vadd.xlane.f32.xlu0 %v625
  %v627 = vpop.xlane.xlu0 %626
  %v628 = vsel %vm64, %v622, 0.0
  %629 = vadd.xlane.f32.xlu0 %v628
  %v630 = vpop.xlane.xlu0 %629
  %v631 = vmul.f32 %v627, %v77
  %v632 = vmul.f32 %v630, %v77
  %v633 = vsub.f32 %v621, %v631
  %v634 = vsub.f32 %v622, %v632
  %v635 = vmul.f32 %v633, %v633
  %v636 = vmul.f32 %v634, %v634
  %v637 = vsel %vm64, %v635, 0.0
  %638 = vadd.xlane.f32.xlu0 %v637
  %v639 = vpop.xlane.xlu0 %638
  %v640 = vsel %vm64, %v636, 0.0
  %641 = vadd.xlane.f32.xlu0 %v640
  %v642 = vpop.xlane.xlu0 %641
  %v643 = vmul.f32 %v639, %v77
  %v644 = vmul.f32 %v642, %v77
  %v645 = vadd.f32 %v643, 1e-12
  %v646 = vadd.f32 %v644, 1e-12
  %v647 = vrsqrt.pop %v645
  %v648 = vmul.f32 %v647, %v645
  %v649 = vmul.f32 %v648, %v647
  %v650 = vmul.f32 0.5, %v649
  %v651 = vsub.f32 1.5, %v650
  %v652 = vmul.f32 %v647, %v651
  %vm653 = vweird.f32 %v645
  %vm654 = vweird.f32 %v647
  %vm655 = vmor %vm653, %vm654
  %v656 = vsel %vm655, %v647, %v652
  %v657 = vrsqrt.pop %v646
  %v658 = vmul.f32 %v657, %v646
  %v659 = vmul.f32 %v658, %v657
  %v660 = vmul.f32 0.5, %v659
  %v661 = vsub.f32 1.5, %v660
  %v662 = vmul.f32 %v657, %v661
  %vm663 = vweird.f32 %v646
  %vm664 = vweird.f32 %v657
  %vm665 = vmor %vm663, %vm664
  %v666 = vsel %vm665, %v657, %v662
  %v667 = vmul.f32 %v633, %v656
  %v668 = vmul.f32 %v634, %v666
  %v670 = vperm.slane %v623, 0
  %v672 = vmul.f32 %v667, %v670
  %v673 = vmul.f32 %v668, %v670
  %v675 = vperm.slane %v624, 0
  %v677 = vadd.f32 %v672, %v675
  %v678 = vadd.f32 %v673, %v675
  %v679 = vpack.c.bf16 %v678, %v677
  %s680 = scalar_lea.vmem %s4, 16
  %v681 = vld [vmem:[%s680] sm:$0xf]
  %v682 = vld [vmem:[%s680 + $0x4] sm:$0xf]
  %v683 = vld [vmem:[%s680 + $0x8] sm:$0xf]
  %v684 = vld [vmem:[%s680 + $0xc] sm:$0xf]
  %s685 = scalar_lea.vmem %s5, 1
  %v686 = vld [vmem:[%s685] sm:$0x1]
  %v688 = vperm.slane %v686, 0
  %v694 = vunpack.c.l.b16 %v681
  %v695 = vunpack.c.l.b16 %v682
  %v696 = vunpack.c.l.b16 %v683
  %v697 = vunpack.c.l.b16 %v684
  %v698 = vpack.c.b16 %v695, %v694
  %v699 = vpack.c.b16 %v697, %v696
  %v703 = vsel %vm64, %v679, 0
  %705 = vmatpush.bf16.msra.mxu0 0
  %706 = vmatpush.bf16.msra.mxu0 0
  %707 = vmatpush.bf16.msra.mxu0 0
  %708 = vmatpush.bf16.msra.mxu0 0
  %709 = vmatpush.bf16.msra.mxu0 0
  %710 = vmatpush.bf16.msra.mxu0 0
  %711 = vmatpush.bf16.msra.mxu0 %v699
  %712 = vmatpush.bf16.msra.mxu0 %v698
  %713 = vmatmul.bf16.gmra.mxu0 %v703
  %v714 = vpop.f32.mrf.mxu0
  %v715 = vadd.f32 %v688, %v714
  %v716 = vpop.f32.mrf.mxu0
  %v717 = vadd.f32 %v688, %v716
  %718 = vdwg.mxu0
  %v719 = vpack.c.bf16 %v715, %v715
  %v720 = vpack.c.bf16 %v717, %v717
  %v722 = vunpack.c.l.b16 %v719
  %v723 = vpack.c.b16 %v722, %v722
  %724 = vrot.lane.b32.xlu0 %v723, 96
  %v725 = vpop.permute.xlu0 %724
  %v727 = vsel %vm175, %v719, 0
  %v730 = vsel %vm175, %v725, 0
  %732 = vmatpush.bf16.xpose.msra.mxu0 0
  %733 = vmatpush.bf16.xpose.msra.mxu0 0
  %734 = vmatpush.bf16.xpose.msra.mxu0 0
  %735 = vmatpush.bf16.xpose.msra.mxu0 0
  %736 = vmatpush.bf16.xpose.msra.mxu0 0
  %737 = vmatpush.bf16.xpose.msra.mxu0 0
  %738 = vmatpush.bf16.xpose.msra.mxu0 0
  %739 = vmatpush.bf16.xpose.msra.mxu0 %v730
  %740 = vmatmul.bf16.gmra.mxu0 %v727
  %v741 = vpop.f32.mrf.mxu0
  %v742 = vadd.f32 %v168, %v741
  %v743 = vpop.f32.mrf.mxu0
  %744 = vdwg.mxu0
  %v745 = vsel %vm195, %v742, -inf
  %746 = vmax.xlane.f32.xlu0 %v745
  %v747 = vpop.xlane.xlu0 %746
  %v748 = vsub.f32 %v742, %v747
  %v749 = vmul.f32 %v748, 1.442695
  %v750 = vpow.pop %v749
  %v751 = vsel %vm195, %v750, 0.0
  %752 = vadd.xlane.f32.xlu0 %v751
  %v753 = vpop.xlane.xlu0 %752
  %v754 = vrcp.pop %v753
  %v755 = vmul.f32 %v750, %v754
  %v756 = vpack.c.bf16 %v755, %v755
  %757 = vrot.lane.b32.xlu0 %v723, 64
  %v758 = vpop.permute.xlu0 %757
  %v760 = vsel %vm195, %v756, 0
  %v763 = vsel %vm213, %v758, 0
  %765 = vmatpush.bf16.msra.mxu0 0
  %766 = vmatpush.bf16.msra.mxu0 0
  %767 = vmatpush.bf16.msra.mxu0 0
  %768 = vmatpush.bf16.msra.mxu0 0
  %769 = vmatpush.bf16.msra.mxu0 0
  %770 = vmatpush.bf16.msra.mxu0 0
  %771 = vmatpush.bf16.msra.mxu0 0
  %772 = vmatpush.bf16.msra.mxu0 %v763
  %773 = vmatmul.bf16.gmra.mxu0 %v760
  %v774 = vpop.f32.mrf.mxu0
  %v775 = vadd.f32 0.0, %v774
  %v776 = vpop.f32.mrf.mxu0
  %777 = vdwg.mxu0
  %778 = vrot.lane.b32.xlu0 %v723, 112
  %v779 = vpop.permute.xlu0 %778
  %780 = vrot.lane.b32.xlu0 %v723, 80
  %v781 = vpop.permute.xlu0 %780
  %v783 = vsel %vm175, %v779, 0
  %v786 = vsel %vm175, %v781, 0
  %788 = vmatpush.bf16.xpose.msra.mxu0 0
  %789 = vmatpush.bf16.xpose.msra.mxu0 0
  %790 = vmatpush.bf16.xpose.msra.mxu0 0
  %791 = vmatpush.bf16.xpose.msra.mxu0 0
  %792 = vmatpush.bf16.xpose.msra.mxu0 0
  %793 = vmatpush.bf16.xpose.msra.mxu0 0
  %794 = vmatpush.bf16.xpose.msra.mxu0 0
  %795 = vmatpush.bf16.xpose.msra.mxu0 %v786
  %796 = vmatmul.bf16.gmra.mxu0 %v783
  %v797 = vpop.f32.mrf.mxu0
  %v798 = vadd.f32 %v168, %v797
  %v799 = vpop.f32.mrf.mxu0
  %800 = vdwg.mxu0
  %v801 = vsel %vm195, %v798, -inf
  %802 = vmax.xlane.f32.xlu0 %v801
  %v803 = vpop.xlane.xlu0 %802
  %v804 = vsub.f32 %v798, %v803
  %v805 = vmul.f32 %v804, 1.442695
  %v806 = vpow.pop %v805
  %v807 = vsel %vm195, %v806, 0.0
  %808 = vadd.xlane.f32.xlu0 %v807
  %v809 = vpop.xlane.xlu0 %808
  %v810 = vrcp.pop %v809
  %v811 = vmul.f32 %v806, %v810
  %v812 = vpack.c.bf16 %v811, %v811
  %813 = vrot.lane.b32.xlu0 %v723, 48
  %v814 = vpop.permute.xlu0 %813
  %v816 = vsel %vm195, %v812, 0
  %v819 = vsel %vm213, %v814, 0
  %821 = vmatpush.bf16.msra.mxu0 0
  %822 = vmatpush.bf16.msra.mxu0 0
  %823 = vmatpush.bf16.msra.mxu0 0
  %824 = vmatpush.bf16.msra.mxu0 0
  %825 = vmatpush.bf16.msra.mxu0 0
  %826 = vmatpush.bf16.msra.mxu0 0
  %827 = vmatpush.bf16.msra.mxu0 0
  %828 = vmatpush.bf16.msra.mxu0 %v819
  %829 = vmatmul.bf16.gmra.mxu0 %v816
  %v830 = vpop.f32.mrf.mxu0
  %v831 = vadd.f32 0.0, %v830
  %v832 = vpop.f32.mrf.mxu0
  %833 = vdwg.mxu0
  %835 = vrot.lane.b32.xlu0 %v831, 16
  %v836 = vpop.permute.xlu0 %835
  %v838 = vsel %vm175, %v775, %v836
  %v840 = vunpack.c.l.b16 %v720
  %v841 = vpack.c.b16 %v840, %v840
  %842 = vrot.lane.b32.xlu0 %v841, 96
  %v843 = vpop.permute.xlu0 %842
  %v845 = vsel %vm175, %v720, 0
  %v848 = vsel %vm175, %v843, 0
  %850 = vmatpush.bf16.xpose.msra.mxu0 0
  %851 = vmatpush.bf16.xpose.msra.mxu0 0
  %852 = vmatpush.bf16.xpose.msra.mxu0 0
  %853 = vmatpush.bf16.xpose.msra.mxu0 0
  %854 = vmatpush.bf16.xpose.msra.mxu0 0
  %855 = vmatpush.bf16.xpose.msra.mxu0 0
  %856 = vmatpush.bf16.xpose.msra.mxu0 0
  %857 = vmatpush.bf16.xpose.msra.mxu0 %v848
  %858 = vmatmul.bf16.gmra.mxu0 %v845
  %v859 = vpop.f32.mrf.mxu0
  %v860 = vadd.f32 %v294, %v859
  %v861 = vpop.f32.mrf.mxu0
  %862 = vdwg.mxu0
  %v863 = vsel %vm195, %v860, -inf
  %864 = vmax.xlane.f32.xlu0 %v863
  %v865 = vpop.xlane.xlu0 %864
  %v866 = vsub.f32 %v860, %v865
  %v867 = vmul.f32 %v866, 1.442695
  %v868 = vpow.pop %v867
  %v869 = vsel %vm195, %v868, 0.0
  %870 = vadd.xlane.f32.xlu0 %v869
  %v871 = vpop.xlane.xlu0 %870
  %v872 = vrcp.pop %v871
  %v873 = vmul.f32 %v868, %v872
  %v874 = vpack.c.bf16 %v873, %v873
  %875 = vrot.lane.b32.xlu0 %v841, 64
  %v876 = vpop.permute.xlu0 %875
  %v878 = vsel %vm195, %v874, 0
  %v881 = vsel %vm213, %v876, 0
  %883 = vmatpush.bf16.msra.mxu0 0
  %884 = vmatpush.bf16.msra.mxu0 0
  %885 = vmatpush.bf16.msra.mxu0 0
  %886 = vmatpush.bf16.msra.mxu0 0
  %887 = vmatpush.bf16.msra.mxu0 0
  %888 = vmatpush.bf16.msra.mxu0 0
  %889 = vmatpush.bf16.msra.mxu0 0
  %890 = vmatpush.bf16.msra.mxu0 %v881
  %891 = vmatmul.bf16.gmra.mxu0 %v878
  %v892 = vpop.f32.mrf.mxu0
  %v893 = vadd.f32 0.0, %v892
  %v894 = vpop.f32.mrf.mxu0
  %895 = vdwg.mxu0
  %896 = vrot.lane.b32.xlu0 %v841, 112
  %v897 = vpop.permute.xlu0 %896
  %898 = vrot.lane.b32.xlu0 %v841, 80
  %v899 = vpop.permute.xlu0 %898
  %v901 = vsel %vm175, %v897, 0
  %v904 = vsel %vm175, %v899, 0
  %906 = vmatpush.bf16.xpose.msra.mxu0 0
  %907 = vmatpush.bf16.xpose.msra.mxu0 0
  %908 = vmatpush.bf16.xpose.msra.mxu0 0
  %909 = vmatpush.bf16.xpose.msra.mxu0 0
  %910 = vmatpush.bf16.xpose.msra.mxu0 0
  %911 = vmatpush.bf16.xpose.msra.mxu0 0
  %912 = vmatpush.bf16.xpose.msra.mxu0 0
  %913 = vmatpush.bf16.xpose.msra.mxu0 %v904
  %914 = vmatmul.bf16.gmra.mxu0 %v901
  %v915 = vpop.f32.mrf.mxu0
  %v916 = vadd.f32 %v294, %v915
  %v917 = vpop.f32.mrf.mxu0
  %918 = vdwg.mxu0
  %v919 = vsel %vm195, %v916, -inf
  %920 = vmax.xlane.f32.xlu0 %v919
  %v921 = vpop.xlane.xlu0 %920
  %v922 = vsub.f32 %v916, %v921
  %v923 = vmul.f32 %v922, 1.442695
  %v924 = vpow.pop %v923
  %v925 = vsel %vm195, %v924, 0.0
  %926 = vadd.xlane.f32.xlu0 %v925
  %v927 = vpop.xlane.xlu0 %926
  %v928 = vrcp.pop %v927
  %v929 = vmul.f32 %v924, %v928
  %v930 = vpack.c.bf16 %v929, %v929
  %931 = vrot.lane.b32.xlu0 %v841, 48
  %v932 = vpop.permute.xlu0 %931
  %v934 = vsel %vm195, %v930, 0
  %v937 = vsel %vm213, %v932, 0
  %939 = vmatpush.bf16.msra.mxu0 0
  %940 = vmatpush.bf16.msra.mxu0 0
  %941 = vmatpush.bf16.msra.mxu0 0
  %942 = vmatpush.bf16.msra.mxu0 0
  %943 = vmatpush.bf16.msra.mxu0 0
  %944 = vmatpush.bf16.msra.mxu0 0
  %945 = vmatpush.bf16.msra.mxu0 0
  %946 = vmatpush.bf16.msra.mxu0 %v937
  %947 = vmatmul.bf16.gmra.mxu0 %v934
  %v948 = vpop.f32.mrf.mxu0
  %v949 = vadd.f32 0.0, %v948
  %v950 = vpop.f32.mrf.mxu0
  %951 = vdwg.mxu0
  %953 = vrot.lane.b32.xlu0 %v949, 16
  %v954 = vpop.permute.xlu0 %953
  %v956 = vsel %vm175, %v893, %v954
  %v957 = vpack.c.bf16 %v956, %v838
  %s958 = scalar_lea.vmem %s6, 16
  %v959 = vld [vmem:[%s958] sm:$0xf]
  %v960 = vld [vmem:[%s958 + $0x4] sm:$0xf]
  %v961 = vld [vmem:[%s958 + $0x8] sm:$0xf]
  %v962 = vld [vmem:[%s958 + $0xc] sm:$0xf]
  %s963 = scalar_lea.vmem %s7, 1
  %v964 = vld [vmem:[%s963] sm:$0x1]
  %v966 = vperm.slane %v964, 0
  %v972 = vunpack.c.l.b16 %v959
  %v973 = vunpack.c.l.b16 %v960
  %v974 = vunpack.c.l.b16 %v961
  %v975 = vunpack.c.l.b16 %v962
  %v976 = vpack.c.b16 %v973, %v972
  %v977 = vpack.c.b16 %v975, %v974
  %v981 = vsel %vm64, %v957, 0
  %983 = vmatpush.bf16.msra.mxu0 0
  %984 = vmatpush.bf16.msra.mxu0 0
  %985 = vmatpush.bf16.msra.mxu0 0
  %986 = vmatpush.bf16.msra.mxu0 0
  %987 = vmatpush.bf16.msra.mxu0 0
  %988 = vmatpush.bf16.msra.mxu0 0
  %989 = vmatpush.bf16.msra.mxu0 %v977
  %990 = vmatpush.bf16.msra.mxu0 %v976
  %991 = vmatmul.bf16.gmra.mxu0 %v981
  %v992 = vpop.f32.mrf.mxu0
  %v993 = vadd.f32 %v966, %v992
  %v994 = vpop.f32.mrf.mxu0
  %v995 = vadd.f32 %v966, %v994
  %996 = vdwg.mxu0
  %v997 = vadd.f32 %v993, %v677
  %v998 = vadd.f32 %v995, %v678
  %s999 = scalar_lea.vmem %s8, 1
  %v1000 = vld [vmem:[%s999] sm:$0x1]
  %s1001 = scalar_lea.vmem %s9, 1
  %v1002 = vld [vmem:[%s1001] sm:$0x1]
  %v1003 = vsel %vm64, %v997, 0.0
  %1004 = vadd.xlane.f32.xlu0 %v1003
  %v1005 = vpop.xlane.xlu0 %1004
  %v1006 = vsel %vm64, %v998, 0.0
  %1007 = vadd.xlane.f32.xlu0 %v1006
  %v1008 = vpop.xlane.xlu0 %1007
  %v1009 = vmul.f32 %v1005, %v77
  %v1010 = vmul.f32 %v1008, %v77
  %v1011 = vsub.f32 %v997, %v1009
  %v1012 = vsub.f32 %v998, %v1010
  %v1013 = vmul.f32 %v1011, %v1011
  %v1014 = vmul.f32 %v1012, %v1012
  %v1015 = vsel %vm64, %v1013, 0.0
  %1016 = vadd.xlane.f32.xlu0 %v1015
  %v1017 = vpop.xlane.xlu0 %1016
  %v1018 = vsel %vm64, %v1014, 0.0
  %1019 = vadd.xlane.f32.xlu0 %v1018
  %v1020 = vpop.xlane.xlu0 %1019
  %v1021 = vmul.f32 %v1017, %v77
  %v1022 = vmul.f32 %v1020, %v77
  %v1023 = vadd.f32 %v1021, 1e-12
  %v1024 = vadd.f32 %v1022, 1e-12
  %v1025 = vrsqrt.pop %v1023
  %v1026 = vmul.f32 %v1025, %v1023
  %v1027 = vmul.f32 %v1026, %v1025
  %v1028 = vmul.f32 0.5, %v1027
  %v1029 = vsub.f32 1.5, %v1028
  %v1030 = vmul.f32 %v1025, %v1029
  %vm1031 = vweird.f32 %v1023
  %vm1032 = vweird.f32 %v1025
  %vm1033 = vmor %vm1031, %vm1032
  %v1034 = vsel %vm1033, %v1025, %v1030
  %v1035 = vrsqrt.pop %v1024
  %v1036 = vmul.f32 %v1035, %v1024
  %v1037 = vmul.f32 %v1036, %v1035
  %v1038 = vmul.f32 0.5, %v1037
  %v1039 = vsub.f32 1.5, %v1038
  %v1040 = vmul.f32 %v1035, %v1039
  %vm1041 = vweird.f32 %v1024
  %vm1042 = vweird.f32 %v1035
  %vm1043 = vmor %vm1041, %vm1042
  %v1044 = vsel %vm1043, %v1035, %v1040
  %v1045 = vmul.f32 %v1011, %v1034
  %v1046 = vmul.f32 %v1012, %v1044
  %v1048 = vperm.slane %v1000, 0
  %v1050 = vmul.f32 %v1045, %v1048
  %v1051 = vmul.f32 %v1046, %v1048
  %v1053 = vperm.slane %v1002, 0
  %v1055 = vadd.f32 %v1050, %v1053
  %v1056 = vadd.f32 %v1051, %v1053
  %v1057 = vpack.c.bf16 %v1056, %v1055
  %s1058 = scalar_lea.vmem %s10, 16
  %v1059 = vld [vmem:[%s1058] sm:$0xf]
  %v1060 = vld [vmem:[%s1058 + $0x4] sm:$0xf]
  %v1061 = vld [vmem:[%s1058 + $0x8] sm:$0xf]
  %v1062 = vld [vmem:[%s1058 + $0xc] sm:$0xf]
  %s1063 = scalar_lea.vmem %s11, 1
  %v1064 = vld [vmem:[%s1063] sm:$0x1]
  %v1066 = vperm.slane %v1064, 0
  %v1072 = vunpack.c.l.b16 %v1059
  %v1073 = vunpack.c.l.b16 %v1060
  %v1074 = vunpack.c.l.b16 %v1061
  %v1075 = vunpack.c.l.b16 %v1062
  %v1076 = vpack.c.b16 %v1073, %v1072
  %v1077 = vpack.c.b16 %v1075, %v1074
  %v1081 = vsel %vm64, %v1057, 0
  %1083 = vmatpush.bf16.msra.mxu0 0
  %1084 = vmatpush.bf16.msra.mxu0 0
  %1085 = vmatpush.bf16.msra.mxu0 0
  %1086 = vmatpush.bf16.msra.mxu0 0
  %1087 = vmatpush.bf16.msra.mxu0 0
  %1088 = vmatpush.bf16.msra.mxu0 0
  %1089 = vmatpush.bf16.msra.mxu0 %v1077
  %1090 = vmatpush.bf16.msra.mxu0 %v1076
  %1091 = vmatmul.bf16.gmra.mxu0 %v1081
  %v1092 = vpop.f32.mrf.mxu0
  %v1093 = vadd.f32 %v1066, %v1092
  %v1094 = vpop.f32.mrf.mxu0
  %v1095 = vadd.f32 %v1066, %v1094
  %1096 = vdwg.mxu0
  %v1097 = vmul.f32 %v1093, 0.5
  %v1098 = vmul.f32 %v1095, 0.5
  %v1099 = vmul.f32 %v1093, 0.044715
  %v1100 = vmul.f32 %v1095, 0.044715
  %v1101 = vmul.f32 %v1099, %v1093
  %v1102 = vmul.f32 %v1100, %v1095
  %v1103 = vmul.f32 %v1101, %v1093
  %v1104 = vmul.f32 %v1102, %v1095
  %v1105 = vadd.f32 %v1093, %v1103
  %v1106 = vadd.f32 %v1095, %v1104
  %v1107 = vmul.f32 %v1105, 0.7978846
  %v1108 = vmul.f32 %v1106, 0.7978846
  %v1109 = vtanh.pop %v1107
  %v1110 = vtanh.pop %v1108
  %v1111 = vadd.f32 %v1109, 1.0
  %v1112 = vadd.f32 %v1110, 1.0
  %v1113 = vmul.f32 %v1097, %v1111
  %v1114 = vmul.f32 %v1098, %v1112
  %v1115 = vpack.c.bf16 %v1114, %v1113
  %s1116 = scalar_lea.vmem %s12, 32
  %v1117 = vld [vmem:[%s1116] sm:$0xf]
  %v1118 = vld [vmem:[%s1116 + $0x4] sm:$0xf]
  %v1119 = vld [vmem:[%s1116 + $0x8] sm:$0xf]
  %v1120 = vld [vmem:[%s1116 + $0xc] sm:$0xf]
  %v1121 = vld [vmem:[%s1116 + $0x10] sm:$0xf]
  %v1122 = vld [vmem:[%s1116 + $0x14] sm:$0xf]
  %v1123 = vld [vmem:[%s1116 + $0x18] sm:$0xf]
  %v1124 = vld [vmem:[%s1116 + $0x1c] sm:$0xf]
  %s1125 = scalar_lea.vmem %s13, 1
  %v1126 = vld [vmem:[%s1125] sm:$0x1]
  %v1128 = vperm.slane %v1126, 0
  %v1138 = vunpack.c.l.b16 %v1117
  %v1139 = vunpack.c.l.b16 %v1118
  %v1140 = vunpack.c.l.b16 %v1119
  %v1141 = vunpack.c.l.b16 %v1120
  %v1142 = vunpack.c.l.b16 %v1121
  %v1143 = vunpack.c.l.b16 %v1122
  %v1144 = vunpack.c.l.b16 %v1123
  %v1145 = vunpack.c.l.b16 %v1124
  %v1146 = vpack.c.b16 %v1139, %v1138
  %v1147 = vpack.c.b16 %v1141, %v1140
  %v1148 = vpack.c.b16 %v1143, %v1142
  %v1149 = vpack.c.b16 %v1145, %v1144
  %v1155 = vsel %vm603, %v1115, 0
  %1157 = vmatpush.bf16.msra.mxu0 0
  %1158 = vmatpush.bf16.msra.mxu0 0
  %1159 = vmatpush.bf16.msra.mxu0 0
  %1160 = vmatpush.bf16.msra.mxu0 0
  %1161 = vmatpush.bf16.msra.mxu0 %v1149
  %1162 = vmatpush.bf16.msra.mxu0 %v1148
  %1163 = vmatpush.bf16.msra.mxu0 %v1147
  %1164 = vmatpush.bf16.msra.mxu0 %v1146
  %1165 = vmatmul.bf16.gmra.mxu0 %v1155
  %v1166 = vpop.f32.mrf.mxu0
  %v1167 = vadd.f32 %v1128, %v1166
  %v1168 = vpop.f32.mrf.mxu0
  %v1169 = vadd.f32 %v1128, %v1168
  %1170 = vdwg.mxu0
  %v1171 = vadd.f32 %v1167, %v1055
  %v1172 = vadd.f32 %v1169, %v1056
  %s1173 = scalar_lea.vmem %s14, 1
  %v1174 = vld [vmem:[%s1173] sm:$0x1]
  %s1175 = scalar_lea.vmem %s15, 1
  %v1176 = vld [vmem:[%s1175] sm:$0x1]
  %v1177 = vsel %vm64, %v1171, 0.0
  %1178 = vadd.xlane.f32.xlu0 %v1177
  %v1179 = vpop.xlane.xlu0 %1178
  %v1180 = vsel %vm64, %v1172, 0.0
  %1181 = vadd.xlane.f32.xlu0 %v1180
  %v1182 = vpop.xlane.xlu0 %1181
  %v1183 = vmul.f32 %v1179, %v77
  %v1184 = vmul.f32 %v1182, %v77
  %v1185 = vsub.f32 %v1171, %v1183
  %v1186 = vsub.f32 %v1172, %v1184
  %v1187 = vmul.f32 %v1185, %v1185
  %v1188 = vmul.f32 %v1186, %v1186
  %v1189 = vsel %vm64, %v1187, 0.0
  %1190 = vadd.xlane.f32.xlu0 %v1189
  %v1191 = vpop.xlane.xlu0 %1190
  %v1192 = vsel %vm64, %v1188, 0.0
  %1193 = vadd.xlane.f32.xlu0 %v1192
  %v1194 = vpop.xlane.xlu0 %1193
  %v1195 = vmul.f32 %v1191, %v77
  %v1196 = vmul.f32 %v1194, %v77
  %v1197 = vadd.f32 %v1195, 1e-12
  %v1198 = vadd.f32 %v1196, 1e-12
  %v1199 = vrsqrt.pop %v1197
  %v1200 = vmul.f32 %v1199, %v1197
  %v1201 = vmul.f32 %v1200, %v1199
  %v1202 = vmul.f32 0.5, %v1201
  %v1203 = vsub.f32 1.5, %v1202
  %v1204 = vmul.f32 %v1199, %v1203
  %vm1205 = vweird.f32 %v1197
  %vm1206 = vweird.f32 %v1199
  %vm1207 = vmor %vm1205, %vm1206
  %v1208 = vsel %vm1207, %v1199, %v1204
  %v1209 = vrsqrt.pop %v1198
  %v1210 = vmul.f32 %v1209, %v1198
  %v1211 = vmul.f32 %v1210, %v1209
  %v1212 = vmul.f32 0.5, %v1211
  %v1213 = vsub.f32 1.5, %v1212
  %v1214 = vmul.f32 %v1209, %v1213
  %vm1215 = vweird.f32 %v1198
  %vm1216 = vweird.f32 %v1209
  %vm1217 = vmor %vm1215, %vm1216
  %v1218 = vsel %vm1217, %v1209, %v1214
  %v1219 = vmul.f32 %v1185, %v1208
  %v1220 = vmul.f32 %v1186, %v1218
  %v1222 = vperm.slane %v1174, 0
  %v1224 = vmul.f32 %v1219, %v1222
  %v1225 = vmul.f32 %v1220, %v1222
  %v1227 = vperm.slane %v1176, 0
  %v1229 = vadd.f32 %v1224, %v1227
  %v1230 = vadd.f32 %v1225, %v1227
  %v1231 = vpack.c.bf16 %v1230, %v1229
  %v1232 = vld [vmem:[%s16] sm:$0xf]
  %v1233 = vld [vmem:[%s16 + $0x4] sm:$0xf]
  %v1234 = vld [vmem:[%s16 + $0x8] sm:$0xf]
  %v1235 = vld [vmem:[%s16 + $0xc] sm:$0xf]
  %v1236 = vld [vmem:[%s17] sm:$0x1]
  %v1238 = vperm.slane %v1236, 0
  %v1244 = vunpack.c.l.b16 %v1232
  %v1245 = vunpack.c.l.b16 %v1233
  %v1246 = vunpack.c.l.b16 %v1234
  %v1247 = vunpack.c.l.b16 %v1235
  %v1248 = vpack.c.b16 %v1245, %v1244
  %v1249 = vpack.c.b16 %v1247, %v1246
  %v1253 = vsel %vm64, %v1231, 0
  %1255 = vmatpush.bf16.msra.mxu0 0
  %1256 = vmatpush.bf16.msra.mxu0 0
  %1257 = vmatpush.bf16.msra.mxu0 0
  %1258 = vmatpush.bf16.msra.mxu0 0
  %1259 = vmatpush.bf16.msra.mxu0 0
  %1260 = vmatpush.bf16.msra.mxu0 0
  %1261 = vmatpush.bf16.msra.mxu0 %v1249
  %1262 = vmatpush.bf16.msra.mxu0 %v1248
  %1263 = vmatmul.bf16.gmra.mxu0 %v1253
  %v1264 = vpop.f32.mrf.mxu0
  %v1265 = vadd.f32 %v1238, %v1264
  %v1266 = vpop.f32.mrf.mxu0
  %v1267 = vadd.f32 %v1238, %v1266
  %1268 = vdwg.mxu0
  %1269 = vst [vmem:[%s18] sm:$0xff] %v1265
  %1270 = vst [vmem:[%s18 + $0x8] sm:$0xff] %v1267
  // Predicated region
  $region74: #{bert_for_ner_forward.1} parent=0 // pred_check
    _
  $region75: #{bert_for_ner_forward.1} parent=0 // pred_check_branch
    %1272 = sbr.rel (0) target = $region77
  $region76: #{bert_for_ner_forward.1} parent=0 // pred_region
    _
  $region77: #{bert_for_ner_forward.1} parent=0 // pred_fallthru
    _
  // Predicated region
  $region78: #{bert_for_ner_forward.1} parent=0 // pred_check
    _
  $region79: #{bert_for_ner_forward.1} parent=0 // pred_check_branch
    %1274 = sbr.rel (0) target = $region81
  $region80: #{bert_for_ner_forward.1} parent=0 // pred_region
    _
  $region81: #{bert_for_ner_forward.1} parent=0 // pred_fallthru
    _

</llo_original>
